<compile_context>
chip_gen: v7x
topology: tpu7x:2x2x1
jax: 0.10.0
libtpu: 0.0.40
codegen_flags: <defaults>
</compile_context>

<pallas_src>
import jax
import jax.numpy as jnp
from jax.experimental import pallas as pl
from jax.experimental.pallas import tpu as pltpu

INPUT_SIZE = 1
HIDDEN = 32        # module default is 100; 32 keeps 4H == 128 (one lane vreg)
OUTPUT = 1
SEQ_LEN = 8
BT = 128           # sequences per grid program (batch on the lane axis)


def lstm_kernel(x_ref, wih_ref, whh_ref, b_ref, wlin_ref, blin_ref, out_ref):
    """One grid program = BT independent sequences (batch on lanes).

    x_ref    : (L, BT)     VMEM  time-major inputs, one sequence per lane
    wih_ref  : (4H, 1)     VMEM  W_ih (input_size == 1), gate order i|f|g|o
    whh_ref  : (4H, H)     VMEM  W_hh (un-transposed; used as matmul LHS)
    b_ref    : (4H, 1)     VMEM  b_ih + b_hh, fused
    wlin_ref : (1, H)      VMEM  linear weight (output_size == 1)
    blin_ref : (1, 1)      VMEM  linear bias
    out_ref  : (1, BT)     VMEM  predictions[-1] for each sequence (lane-dense)
    """
    H = whh_ref.shape[1]
    L = x_ref.shape[0]
    bt = x_ref.shape[1]

    x = x_ref[...]                                   # (L, BT), read once
    wih = wih_ref[...]                               # (4H, 1)
    whh = whh_ref[...]                               # (4H, H), stays resident
    b = b_ref[...]                                   # (4H, 1)

    h = jnp.zeros((H, bt), jnp.float32)
    c = jnp.zeros((H, bt), jnp.float32)

    # L is a static Python int -> fully unrolled serial recurrence.
    for t in range(L):
        x_t = x[t:t + 1, :]                          # (1, BT)
        # Broadcast FMA input projection + bias: (4H,1)*(1,BT)+(4H,1)->(4H,BT).
        pre = x_t * wih + b
        # Recurrent term: (4H,H)x(H,BT) -> (4H,BT), one MXU pass, f32 acc.
        gates = pre + jnp.dot(whh, h, preferred_element_type=jnp.float32)

        # Sliced activations (sublane-aligned at H=32): sigmoid on i|f and o,
        # tanh only on g -> half the EUP vreg-ops of full-width activations.
        if_sig = jax.nn.sigmoid(gates[0:2 * H, :])   # (2H, BT)  i | f
        g = jnp.tanh(gates[2 * H:3 * H, :])          # (H, BT)
        o = jax.nn.sigmoid(gates[3 * H:4 * H, :])    # (H, BT)
        i = if_sig[0:H, :]
        f = if_sig[H:2 * H, :]

        c = f * c + i * g
        h = o * jnp.tanh(c)

    # Linear head as a second MXU dot, result already lane-dense: (1,H)x(H,BT).
    out_ref[...] = (
        jnp.dot(wlin_ref[...], h, preferred_element_type=jnp.float32)
        + blin_ref[...]
    )


def lstm_forward_batched(x_batch, params, bt=BT):
    """x_batch: (B, L) float32. Returns (B, OUTPUT): predictions[-1] per sequence."""
    wih_f, whh_f, b_f, wlin, blin = params
    B, L = x_batch.shape
    H = whh_f.shape[1]

    num_tiles = pl.cdiv(B, bt)
    b_pad = num_tiles * bt
    x = jnp.zeros((b_pad, L), jnp.float32).at[:B].set(x_batch.astype(jnp.float32))
    # Tile the batch onto lanes: x_tiled[t, l, j] = x[t*bt + j, l].
    x_tiled = x.reshape(num_tiles, bt, L).transpose(0, 2, 1)      # (T, L, BT)

    out = pl.pallas_call(
        lstm_kernel,
        out_shape=jax.ShapeDtypeStruct((num_tiles, 1, bt), jnp.float32),
        grid=(num_tiles,),
        in_specs=[
            pl.BlockSpec((None, L, bt), lambda t: (t, 0, 0)),     # x (per lane tile)
            pl.BlockSpec((4 * H, 1), lambda t: (0, 0)),           # wih fused
            pl.BlockSpec((4 * H, H), lambda t: (0, 0)),           # whh (LHS layout)
            pl.BlockSpec((4 * H, 1), lambda t: (0, 0)),           # bias fused
            pl.BlockSpec((1, H), lambda t: (0, 0)),               # linear weight
            pl.BlockSpec((1, 1), lambda t: (0, 0)),               # linear bias
        ],
        out_specs=pl.BlockSpec((None, 1, bt), lambda t: (t, 0, 0)),  # lane-dense
        compiler_params=pltpu.CompilerParams(
            dimension_semantics=("parallel",)),                   # megacore on v7x
    )(x_tiled, wih_f, whh_f, b_f, wlin, blin)

    return out.reshape(num_tiles * bt)[:B].reshape(B, OUTPUT)


def lstm_forward(input_seq, params):
    """Mirrors LSTM.forward(): one 1-D sequence in, predictions[-1] (shape (O,)) out."""
    return lstm_forward_batched(input_seq.reshape(1, -1), params)[0]


def lstm_ref(x, weight_ih, weight_hh, bias_ih, bias_hh, lin_w, lin_b):
    """Pure-JAX reference of torch.nn.LSTM(1 layer) + Linear, returns predictions[-1]."""
    H = weight_hh.shape[1]

    def step(carry, x_t):
        h, c = carry
        gates = x_t @ weight_ih.T + bias_ih + h @ weight_hh.T + bias_hh
        i = jax.nn.sigmoid(gates[0:H])
        f = jax.nn.sigmoid(gates[H:2 * H])
        g = jnp.tanh(gates[2 * H:3 * H])
        o = jax.nn.sigmoid(gates[3 * H:4 * H])
        c = f * c + i * g
        h = o * jnp.tanh(c)
        return (h, c), h

    (_, _), hs = jax.lax.scan(
        step, (jnp.zeros(H, jnp.float32), jnp.zeros(H, jnp.float32)), x)
    preds = hs @ lin_w.T + lin_b
    return preds[-1]


if __name__ == "__main__":
    H, I, O, L = HIDDEN, INPUT_SIZE, OUTPUT, SEQ_LEN
    B = 256                                  # 2 lane tiles -> >=2 programs (v7x megacore)
    key = jax.random.PRNGKey(0)
    ks = jax.random.split(key, 7)
    s = 1.0 / float(jnp.sqrt(H))

    # Deterministic synthetic parameters, PyTorch-shaped (gate order i, f, g, o).
    weight_ih = jax.random.uniform(ks[0], (4 * H, I), jnp.float32, -s, s)   # lstm.weight_ih_l0
    weight_hh = jax.random.uniform(ks[1], (4 * H, H), jnp.float32, -s, s)   # lstm.weight_hh_l0
    bias_ih   = jax.random.uniform(ks[2], (4 * H,),   jnp.float32, -s, s)   # lstm.bias_ih_l0
    bias_hh   = jax.random.uniform(ks[3], (4 * H,),   jnp.float32, -s, s)   # lstm.bias_hh_l0
    lin_w     = jax.random.uniform(ks[4], (O, H),     jnp.float32, -s, s)   # linear.weight
    lin_b     = jax.random.uniform(ks[5], (O,),       jnp.float32, -s, s)   # linear.bias
    x_batch   = jax.random.normal(ks[6], (B, L), jnp.float32)               # B price windows

    # Repack parameters into lane/sublane-dense kernel layouts (gates on sublanes).
    wih_f = weight_ih                                    # (4H, I) == (128, 1)
    whh_f = weight_hh                                    # (4H, H) == (128, 32), MXU LHS
    b_f   = (bias_ih + bias_hh).reshape(4 * H, 1)        # (128, 1)
    wlin  = lin_w                                        # (O, H)  == (1, 32)
    blin  = lin_b.reshape(1, O)                          # (1, 1)
    params = (wih_f, whh_f, b_f, wlin, blin)

    # Pure-JAX reference for every sequence.
    ref_all = jax.vmap(
        lambda xs: lstm_ref(xs.reshape(L, I), weight_ih, weight_hh,
                            bias_ih, bias_hh, lin_w, lin_b))(x_batch)       # (B, O)

    # Single-sequence path (exactly the module's forward()).
    single = lstm_forward(x_batch[0], params)
    jax.block_until_ready(single)
    assert single.shape == (O,), single.shape
    assert jnp.allclose(single, ref_all[0], atol=1e-5, rtol=1e-5), (single, ref_all[0])

    # Batched path: each row is an independent forward() (predictions[-1]).
    out_b = lstm_forward_batched(x_batch, params)
    jax.block_until_ready(out_b)
    assert out_b.shape == (B, O), out_b.shape
    assert jnp.allclose(out_b, ref_all, atol=1e-5, rtol=1e-5), (
        jnp.max(jnp.abs(out_b - ref_all)))

    print("KERNEL_OK")
</pallas_src>

<mosaic_0001>
module attributes {stable_mosaic.version = 11 : i64} {
  func.func @lstm_kernel(%arg0: i32, %arg1: memref<1x8x128xf32, #tpu.memory_space<vmem>>, %arg2: memref<128x1xf32, #tpu.memory_space<vmem>>, %arg3: memref<128x32xf32, #tpu.memory_space<vmem>>, %arg4: memref<128x1xf32, #tpu.memory_space<vmem>>, %arg5: memref<1x32xf32, #tpu.memory_space<vmem>>, %arg6: memref<1x1xf32, #tpu.memory_space<vmem>>, %arg7: memref<1x1x128xf32, #tpu.memory_space<vmem>>) attributes {dimension_semantics = [#tpu.dimension_semantics<parallel>], iteration_bounds = array<i64: 1>, scalar_prefetch = 0 : i64, scratch_operands = 0 : i64, tpu.core_type = #tpu.core_type<tc>, window_params = [{transform_indices = @transform_0, window_bounds = array<i64: 1, 8, 128>}, {pipeline_mode = #tpu.pipeline_mode<synchronous>, transform_indices = @transform_1, window_bounds = array<i64: 128, 1>}, {pipeline_mode = #tpu.pipeline_mode<synchronous>, transform_indices = @transform_2, window_bounds = array<i64: 128, 32>}, {pipeline_mode = #tpu.pipeline_mode<synchronous>, transform_indices = @transform_3, window_bounds = array<i64: 128, 1>}, {pipeline_mode = #tpu.pipeline_mode<synchronous>, transform_indices = @transform_4, window_bounds = array<i64: 1, 32>}, {pipeline_mode = #tpu.pipeline_mode<synchronous>, transform_indices = @transform_5, window_bounds = array<i64: 1, 1>}, {transform_indices = @transform_6, window_bounds = array<i64: 1, 1, 128>}]} {
    %c0 = arith.constant 0 : index
    %c0_0 = arith.constant 0 : index
    %c0_1 = arith.constant 0 : index
    %0 = vector.load %arg1[%c0, %c0_0, %c0_1] : memref<1x8x128xf32, #tpu.memory_space<vmem>>, vector<1x8x128xf32>
    %1 = vector.shape_cast %0 : vector<1x8x128xf32> to vector<8x128xf32>
    %c0_2 = arith.constant 0 : index
    %c0_3 = arith.constant 0 : index
    %2 = vector.load %arg2[%c0_2, %c0_3] : memref<128x1xf32, #tpu.memory_space<vmem>>, vector<128x1xf32>
    %c0_4 = arith.constant 0 : index
    %c0_5 = arith.constant 0 : index
    %3 = vector.load %arg3[%c0_4, %c0_5] : memref<128x32xf32, #tpu.memory_space<vmem>>, vector<128x32xf32>
    %c0_6 = arith.constant 0 : index
    %c0_7 = arith.constant 0 : index
    %4 = vector.load %arg4[%c0_6, %c0_7] : memref<128x1xf32, #tpu.memory_space<vmem>>, vector<128x1xf32>
    %cst = arith.constant 0.000000e+00 : f32
    %5 = vector.broadcast %cst : f32 to vector<32x128xf32>
    %cst_8 = arith.constant 0.000000e+00 : f32
    %6 = vector.broadcast %cst_8 : f32 to vector<32x128xf32>
    %7 = vector.extract_strided_slice %1 {offsets = [0, 0], sizes = [1, 128], strides = [1, 1]} : vector<8x128xf32> to vector<1x128xf32>
    %8 = vector.broadcast %7 : vector<1x128xf32> to vector<128x128xf32>
    %9 = vector.broadcast %2 : vector<128x1xf32> to vector<128x128xf32>
    %10 = arith.mulf %8, %9 : vector<128x128xf32>
    %11 = vector.broadcast %4 : vector<128x1xf32> to vector<128x128xf32>
    %12 = arith.addf %10, %11 : vector<128x128xf32>
    %cst_9 = arith.constant dense<0.000000e+00> : vector<128x128xf32>
    %13 = tpu.matmul %3, %5, %cst_9 {dimension_numbers = #tpu.dot_dimension_numbers<[1], [0], [0], [1], [0, 0, 1, 1], [], []>} : vector<128x32xf32>, vector<32x128xf32>, vector<128x128xf32> -> vector<128x128xf32>
    %14 = arith.addf %12, %13 : vector<128x128xf32>
    %15 = vector.extract_strided_slice %14 {offsets = [0, 0], sizes = [64, 128], strides = [1, 1]} : vector<128x128xf32> to vector<64x128xf32>
    %16 = arith.negf %15 : vector<64x128xf32>
    %17 = math.exp %16 : vector<64x128xf32>
    %cst_10 = arith.constant 1.000000e+00 : f32
    %18 = vector.broadcast %cst_10 : f32 to vector<64x128xf32>
    %19 = arith.addf %18, %17 : vector<64x128xf32>
    %20 = arith.divf %18, %19 : vector<64x128xf32>
    %21 = vector.extract_strided_slice %14 {offsets = [64, 0], sizes = [32, 128], strides = [1, 1]} : vector<128x128xf32> to vector<32x128xf32>
    %22 = math.tanh %21 : vector<32x128xf32>
    %23 = vector.extract_strided_slice %14 {offsets = [96, 0], sizes = [32, 128], strides = [1, 1]} : vector<128x128xf32> to vector<32x128xf32>
    %24 = arith.negf %23 : vector<32x128xf32>
    %25 = math.exp %24 : vector<32x128xf32>
    %cst_11 = arith.constant 1.000000e+00 : f32
    %26 = vector.broadcast %cst_11 : f32 to vector<32x128xf32>
    %27 = arith.addf %26, %25 : vector<32x128xf32>
    %28 = arith.divf %26, %27 : vector<32x128xf32>
    %29 = vector.extract_strided_slice %20 {offsets = [0, 0], sizes = [32, 128], strides = [1, 1]} : vector<64x128xf32> to vector<32x128xf32>
    %30 = vector.extract_strided_slice %20 {offsets = [32, 0], sizes = [32, 128], strides = [1, 1]} : vector<64x128xf32> to vector<32x128xf32>
    %31 = arith.mulf %30, %6 : vector<32x128xf32>
    %32 = arith.mulf %29, %22 : vector<32x128xf32>
    %33 = arith.addf %31, %32 : vector<32x128xf32>
    %34 = math.tanh %33 : vector<32x128xf32>
    %35 = arith.mulf %28, %34 : vector<32x128xf32>
    %36 = vector.extract_strided_slice %1 {offsets = [1, 0], sizes = [1, 128], strides = [1, 1]} : vector<8x128xf32> to vector<1x128xf32>
    %37 = vector.broadcast %36 : vector<1x128xf32> to vector<128x128xf32>
    %38 = vector.broadcast %2 : vector<128x1xf32> to vector<128x128xf32>
    %39 = arith.mulf %37, %38 : vector<128x128xf32>
    %40 = vector.broadcast %4 : vector<128x1xf32> to vector<128x128xf32>
    %41 = arith.addf %39, %40 : vector<128x128xf32>
    %cst_12 = arith.constant dense<0.000000e+00> : vector<128x128xf32>
    %42 = tpu.matmul %3, %35, %cst_12 {dimension_numbers = #tpu.dot_dimension_numbers<[1], [0], [0], [1], [0, 0, 1, 1], [], []>} : vector<128x32xf32>, vector<32x128xf32>, vector<128x128xf32> -> vector<128x128xf32>
    %43 = arith.addf %41, %42 : vector<128x128xf32>
    %44 = vector.extract_strided_slice %43 {offsets = [0, 0], sizes = [64, 128], strides = [1, 1]} : vector<128x128xf32> to vector<64x128xf32>
    %45 = arith.negf %44 : vector<64x128xf32>
    %46 = math.exp %45 : vector<64x128xf32>
    %cst_13 = arith.constant 1.000000e+00 : f32
    %47 = vector.broadcast %cst_13 : f32 to vector<64x128xf32>
    %48 = arith.addf %47, %46 : vector<64x128xf32>
    %49 = arith.divf %47, %48 : vector<64x128xf32>
    %50 = vector.extract_strided_slice %43 {offsets = [64, 0], sizes = [32, 128], strides = [1, 1]} : vector<128x128xf32> to vector<32x128xf32>
    %51 = math.tanh %50 : vector<32x128xf32>
    %52 = vector.extract_strided_slice %43 {offsets = [96, 0], sizes = [32, 128], strides = [1, 1]} : vector<128x128xf32> to vector<32x128xf32>
    %53 = arith.negf %52 : vector<32x128xf32>
    %54 = math.exp %53 : vector<32x128xf32>
    %cst_14 = arith.constant 1.000000e+00 : f32
    %55 = vector.broadcast %cst_14 : f32 to vector<32x128xf32>
    %56 = arith.addf %55, %54 : vector<32x128xf32>
    %57 = arith.divf %55, %56 : vector<32x128xf32>
    %58 = vector.extract_strided_slice %49 {offsets = [0, 0], sizes = [32, 128], strides = [1, 1]} : vector<64x128xf32> to vector<32x128xf32>
    %59 = vector.extract_strided_slice %49 {offsets = [32, 0], sizes = [32, 128], strides = [1, 1]} : vector<64x128xf32> to vector<32x128xf32>
    %60 = arith.mulf %59, %33 : vector<32x128xf32>
    %61 = arith.mulf %58, %51 : vector<32x128xf32>
    %62 = arith.addf %60, %61 : vector<32x128xf32>
    %63 = math.tanh %62 : vector<32x128xf32>
    %64 = arith.mulf %57, %63 : vector<32x128xf32>
    %65 = vector.extract_strided_slice %1 {offsets = [2, 0], sizes = [1, 128], strides = [1, 1]} : vector<8x128xf32> to vector<1x128xf32>
    %66 = vector.broadcast %65 : vector<1x128xf32> to vector<128x128xf32>
    %67 = vector.broadcast %2 : vector<128x1xf32> to vector<128x128xf32>
    %68 = arith.mulf %66, %67 : vector<128x128xf32>
    %69 = vector.broadcast %4 : vector<128x1xf32> to vector<128x128xf32>
    %70 = arith.addf %68, %69 : vector<128x128xf32>
    %cst_15 = arith.constant dense<0.000000e+00> : vector<128x128xf32>
    %71 = tpu.matmul %3, %64, %cst_15 {dimension_numbers = #tpu.dot_dimension_numbers<[1], [0], [0], [1], [0, 0, 1, 1], [], []>} : vector<128x32xf32>, vector<32x128xf32>, vector<128x128xf32> -> vector<128x128xf32>
    %72 = arith.addf %70, %71 : vector<128x128xf32>
    %73 = vector.extract_strided_slice %72 {offsets = [0, 0], sizes = [64, 128], strides = [1, 1]} : vector<128x128xf32> to vector<64x128xf32>
    %74 = arith.negf %73 : vector<64x128xf32>
    %75 = math.exp %74 : vector<64x128xf32>
    %cst_16 = arith.constant 1.000000e+00 : f32
    %76 = vector.broadcast %cst_16 : f32 to vector<64x128xf32>
    %77 = arith.addf %76, %75 : vector<64x128xf32>
    %78 = arith.divf %76, %77 : vector<64x128xf32>
    %79 = vector.extract_strided_slice %72 {offsets = [64, 0], sizes = [32, 128], strides = [1, 1]} : vector<128x128xf32> to vector<32x128xf32>
    %80 = math.tanh %79 : vector<32x128xf32>
    %81 = vector.extract_strided_slice %72 {offsets = [96, 0], sizes = [32, 128], strides = [1, 1]} : vector<128x128xf32> to vector<32x128xf32>
    %82 = arith.negf %81 : vector<32x128xf32>
    %83 = math.exp %82 : vector<32x128xf32>
    %cst_17 = arith.constant 1.000000e+00 : f32
    %84 = vector.broadcast %cst_17 : f32 to vector<32x128xf32>
    %85 = arith.addf %84, %83 : vector<32x128xf32>
    %86 = arith.divf %84, %85 : vector<32x128xf32>
    %87 = vector.extract_strided_slice %78 {offsets = [0, 0], sizes = [32, 128], strides = [1, 1]} : vector<64x128xf32> to vector<32x128xf32>
    %88 = vector.extract_strided_slice %78 {offsets = [32, 0], sizes = [32, 128], strides = [1, 1]} : vector<64x128xf32> to vector<32x128xf32>
    %89 = arith.mulf %88, %62 : vector<32x128xf32>
    %90 = arith.mulf %87, %80 : vector<32x128xf32>
    %91 = arith.addf %89, %90 : vector<32x128xf32>
    %92 = math.tanh %91 : vector<32x128xf32>
    %93 = arith.mulf %86, %92 : vector<32x128xf32>
    %94 = vector.extract_strided_slice %1 {offsets = [3, 0], sizes = [1, 128], strides = [1, 1]} : vector<8x128xf32> to vector<1x128xf32>
    %95 = vector.broadcast %94 : vector<1x128xf32> to vector<128x128xf32>
    %96 = vector.broadcast %2 : vector<128x1xf32> to vector<128x128xf32>
    %97 = arith.mulf %95, %96 : vector<128x128xf32>
    %98 = vector.broadcast %4 : vector<128x1xf32> to vector<128x128xf32>
    %99 = arith.addf %97, %98 : vector<128x128xf32>
    %cst_18 = arith.constant dense<0.000000e+00> : vector<128x128xf32>
    %100 = tpu.matmul %3, %93, %cst_18 {dimension_numbers = #tpu.dot_dimension_numbers<[1], [0], [0], [1], [0, 0, 1, 1], [], []>} : vector<128x32xf32>, vector<32x128xf32>, vector<128x128xf32> -> vector<128x128xf32>
    %101 = arith.addf %99, %100 : vector<128x128xf32>
    %102 = vector.extract_strided_slice %101 {offsets = [0, 0], sizes = [64, 128], strides = [1, 1]} : vector<128x128xf32> to vector<64x128xf32>
    %103 = arith.negf %102 : vector<64x128xf32>
    %104 = math.exp %103 : vector<64x128xf32>
    %cst_19 = arith.constant 1.000000e+00 : f32
    %105 = vector.broadcast %cst_19 : f32 to vector<64x128xf32>
    %106 = arith.addf %105, %104 : vector<64x128xf32>
    %107 = arith.divf %105, %106 : vector<64x128xf32>
    %108 = vector.extract_strided_slice %101 {offsets = [64, 0], sizes = [32, 128], strides = [1, 1]} : vector<128x128xf32> to vector<32x128xf32>
    %109 = math.tanh %108 : vector<32x128xf32>
    %110 = vector.extract_strided_slice %101 {offsets = [96, 0], sizes = [32, 128], strides = [1, 1]} : vector<128x128xf32> to vector<32x128xf32>
    %111 = arith.negf %110 : vector<32x128xf32>
    %112 = math.exp %111 : vector<32x128xf32>
    %cst_20 = arith.constant 1.000000e+00 : f32
    %113 = vector.broadcast %cst_20 : f32 to vector<32x128xf32>
    %114 = arith.addf %113, %112 : vector<32x128xf32>
    %115 = arith.divf %113, %114 : vector<32x128xf32>
    %116 = vector.extract_strided_slice %107 {offsets = [0, 0], sizes = [32, 128], strides = [1, 1]} : vector<64x128xf32> to vector<32x128xf32>
    %117 = vector.extract_strided_slice %107 {offsets = [32, 0], sizes = [32, 128], strides = [1, 1]} : vector<64x128xf32> to vector<32x128xf32>
    %118 = arith.mulf %117, %91 : vector<32x128xf32>
    %119 = arith.mulf %116, %109 : vector<32x128xf32>
    %120 = arith.addf %118, %119 : vector<32x128xf32>
    %121 = math.tanh %120 : vector<32x128xf32>
    %122 = arith.mulf %115, %121 : vector<32x128xf32>
    %123 = vector.extract_strided_slice %1 {offsets = [4, 0], sizes = [1, 128], strides = [1, 1]} : vector<8x128xf32> to vector<1x128xf32>
    %124 = vector.broadcast %123 : vector<1x128xf32> to vector<128x128xf32>
    %125 = vector.broadcast %2 : vector<128x1xf32> to vector<128x128xf32>
    %126 = arith.mulf %124, %125 : vector<128x128xf32>
    %127 = vector.broadcast %4 : vector<128x1xf32> to vector<128x128xf32>
    %128 = arith.addf %126, %127 : vector<128x128xf32>
    %cst_21 = arith.constant dense<0.000000e+00> : vector<128x128xf32>
    %129 = tpu.matmul %3, %122, %cst_21 {dimension_numbers = #tpu.dot_dimension_numbers<[1], [0], [0], [1], [0, 0, 1, 1], [], []>} : vector<128x32xf32>, vector<32x128xf32>, vector<128x128xf32> -> vector<128x128xf32>
    %130 = arith.addf %128, %129 : vector<128x128xf32>
    %131 = vector.extract_strided_slice %130 {offsets = [0, 0], sizes = [64, 128], strides = [1, 1]} : vector<128x128xf32> to vector<64x128xf32>
    %132 = arith.negf %131 : vector<64x128xf32>
    %133 = math.exp %132 : vector<64x128xf32>
    %cst_22 = arith.constant 1.000000e+00 : f32
    %134 = vector.broadcast %cst_22 : f32 to vector<64x128xf32>
    %135 = arith.addf %134, %133 : vector<64x128xf32>
    %136 = arith.divf %134, %135 : vector<64x128xf32>
    %137 = vector.extract_strided_slice %130 {offsets = [64, 0], sizes = [32, 128], strides = [1, 1]} : vector<128x128xf32> to vector<32x128xf32>
    %138 = math.tanh %137 : vector<32x128xf32>
    %139 = vector.extract_strided_slice %130 {offsets = [96, 0], sizes = [32, 128], strides = [1, 1]} : vector<128x128xf32> to vector<32x128xf32>
    %140 = arith.negf %139 : vector<32x128xf32>
    %141 = math.exp %140 : vector<32x128xf32>
    %cst_23 = arith.constant 1.000000e+00 : f32
    %142 = vector.broadcast %cst_23 : f32 to vector<32x128xf32>
    %143 = arith.addf %142, %141 : vector<32x128xf32>
    %144 = arith.divf %142, %143 : vector<32x128xf32>
    %145 = vector.extract_strided_slice %136 {offsets = [0, 0], sizes = [32, 128], strides = [1, 1]} : vector<64x128xf32> to vector<32x128xf32>
    %146 = vector.extract_strided_slice %136 {offsets = [32, 0], sizes = [32, 128], strides = [1, 1]} : vector<64x128xf32> to vector<32x128xf32>
    %147 = arith.mulf %146, %120 : vector<32x128xf32>
    %148 = arith.mulf %145, %138 : vector<32x128xf32>
    %149 = arith.addf %147, %148 : vector<32x128xf32>
    %150 = math.tanh %149 : vector<32x128xf32>
    %151 = arith.mulf %144, %150 : vector<32x128xf32>
    %152 = vector.extract_strided_slice %1 {offsets = [5, 0], sizes = [1, 128], strides = [1, 1]} : vector<8x128xf32> to vector<1x128xf32>
    %153 = vector.broadcast %152 : vector<1x128xf32> to vector<128x128xf32>
    %154 = vector.broadcast %2 : vector<128x1xf32> to vector<128x128xf32>
    %155 = arith.mulf %153, %154 : vector<128x128xf32>
    %156 = vector.broadcast %4 : vector<128x1xf32> to vector<128x128xf32>
    %157 = arith.addf %155, %156 : vector<128x128xf32>
    %cst_24 = arith.constant dense<0.000000e+00> : vector<128x128xf32>
    %158 = tpu.matmul %3, %151, %cst_24 {dimension_numbers = #tpu.dot_dimension_numbers<[1], [0], [0], [1], [0, 0, 1, 1], [], []>} : vector<128x32xf32>, vector<32x128xf32>, vector<128x128xf32> -> vector<128x128xf32>
    %159 = arith.addf %157, %158 : vector<128x128xf32>
    %160 = vector.extract_strided_slice %159 {offsets = [0, 0], sizes = [64, 128], strides = [1, 1]} : vector<128x128xf32> to vector<64x128xf32>
    %161 = arith.negf %160 : vector<64x128xf32>
    %162 = math.exp %161 : vector<64x128xf32>
    %cst_25 = arith.constant 1.000000e+00 : f32
    %163 = vector.broadcast %cst_25 : f32 to vector<64x128xf32>
    %164 = arith.addf %163, %162 : vector<64x128xf32>
    %165 = arith.divf %163, %164 : vector<64x128xf32>
    %166 = vector.extract_strided_slice %159 {offsets = [64, 0], sizes = [32, 128], strides = [1, 1]} : vector<128x128xf32> to vector<32x128xf32>
    %167 = math.tanh %166 : vector<32x128xf32>
    %168 = vector.extract_strided_slice %159 {offsets = [96, 0], sizes = [32, 128], strides = [1, 1]} : vector<128x128xf32> to vector<32x128xf32>
    %169 = arith.negf %168 : vector<32x128xf32>
    %170 = math.exp %169 : vector<32x128xf32>
    %cst_26 = arith.constant 1.000000e+00 : f32
    %171 = vector.broadcast %cst_26 : f32 to vector<32x128xf32>
    %172 = arith.addf %171, %170 : vector<32x128xf32>
    %173 = arith.divf %171, %172 : vector<32x128xf32>
    %174 = vector.extract_strided_slice %165 {offsets = [0, 0], sizes = [32, 128], strides = [1, 1]} : vector<64x128xf32> to vector<32x128xf32>
    %175 = vector.extract_strided_slice %165 {offsets = [32, 0], sizes = [32, 128], strides = [1, 1]} : vector<64x128xf32> to vector<32x128xf32>
    %176 = arith.mulf %175, %149 : vector<32x128xf32>
    %177 = arith.mulf %174, %167 : vector<32x128xf32>
    %178 = arith.addf %176, %177 : vector<32x128xf32>
    %179 = math.tanh %178 : vector<32x128xf32>
    %180 = arith.mulf %173, %179 : vector<32x128xf32>
    %181 = vector.extract_strided_slice %1 {offsets = [6, 0], sizes = [1, 128], strides = [1, 1]} : vector<8x128xf32> to vector<1x128xf32>
    %182 = vector.broadcast %181 : vector<1x128xf32> to vector<128x128xf32>
    %183 = vector.broadcast %2 : vector<128x1xf32> to vector<128x128xf32>
    %184 = arith.mulf %182, %183 : vector<128x128xf32>
    %185 = vector.broadcast %4 : vector<128x1xf32> to vector<128x128xf32>
    %186 = arith.addf %184, %185 : vector<128x128xf32>
    %cst_27 = arith.constant dense<0.000000e+00> : vector<128x128xf32>
    %187 = tpu.matmul %3, %180, %cst_27 {dimension_numbers = #tpu.dot_dimension_numbers<[1], [0], [0], [1], [0, 0, 1, 1], [], []>} : vector<128x32xf32>, vector<32x128xf32>, vector<128x128xf32> -> vector<128x128xf32>
    %188 = arith.addf %186, %187 : vector<128x128xf32>
    %189 = vector.extract_strided_slice %188 {offsets = [0, 0], sizes = [64, 128], strides = [1, 1]} : vector<128x128xf32> to vector<64x128xf32>
    %190 = arith.negf %189 : vector<64x128xf32>
    %191 = math.exp %190 : vector<64x128xf32>
    %cst_28 = arith.constant 1.000000e+00 : f32
    %192 = vector.broadcast %cst_28 : f32 to vector<64x128xf32>
    %193 = arith.addf %192, %191 : vector<64x128xf32>
    %194 = arith.divf %192, %193 : vector<64x128xf32>
    %195 = vector.extract_strided_slice %188 {offsets = [64, 0], sizes = [32, 128], strides = [1, 1]} : vector<128x128xf32> to vector<32x128xf32>
    %196 = math.tanh %195 : vector<32x128xf32>
    %197 = vector.extract_strided_slice %188 {offsets = [96, 0], sizes = [32, 128], strides = [1, 1]} : vector<128x128xf32> to vector<32x128xf32>
    %198 = arith.negf %197 : vector<32x128xf32>
    %199 = math.exp %198 : vector<32x128xf32>
    %cst_29 = arith.constant 1.000000e+00 : f32
    %200 = vector.broadcast %cst_29 : f32 to vector<32x128xf32>
    %201 = arith.addf %200, %199 : vector<32x128xf32>
    %202 = arith.divf %200, %201 : vector<32x128xf32>
    %203 = vector.extract_strided_slice %194 {offsets = [0, 0], sizes = [32, 128], strides = [1, 1]} : vector<64x128xf32> to vector<32x128xf32>
    %204 = vector.extract_strided_slice %194 {offsets = [32, 0], sizes = [32, 128], strides = [1, 1]} : vector<64x128xf32> to vector<32x128xf32>
    %205 = arith.mulf %204, %178 : vector<32x128xf32>
    %206 = arith.mulf %203, %196 : vector<32x128xf32>
    %207 = arith.addf %205, %206 : vector<32x128xf32>
    %208 = math.tanh %207 : vector<32x128xf32>
    %209 = arith.mulf %202, %208 : vector<32x128xf32>
    %210 = vector.extract_strided_slice %1 {offsets = [7, 0], sizes = [1, 128], strides = [1, 1]} : vector<8x128xf32> to vector<1x128xf32>
    %211 = vector.broadcast %210 : vector<1x128xf32> to vector<128x128xf32>
    %212 = vector.broadcast %2 : vector<128x1xf32> to vector<128x128xf32>
    %213 = arith.mulf %211, %212 : vector<128x128xf32>
    %214 = vector.broadcast %4 : vector<128x1xf32> to vector<128x128xf32>
    %215 = arith.addf %213, %214 : vector<128x128xf32>
    %cst_30 = arith.constant dense<0.000000e+00> : vector<128x128xf32>
    %216 = tpu.matmul %3, %209, %cst_30 {dimension_numbers = #tpu.dot_dimension_numbers<[1], [0], [0], [1], [0, 0, 1, 1], [], []>} : vector<128x32xf32>, vector<32x128xf32>, vector<128x128xf32> -> vector<128x128xf32>
    %217 = arith.addf %215, %216 : vector<128x128xf32>
    %218 = vector.extract_strided_slice %217 {offsets = [0, 0], sizes = [64, 128], strides = [1, 1]} : vector<128x128xf32> to vector<64x128xf32>
    %219 = arith.negf %218 : vector<64x128xf32>
    %220 = math.exp %219 : vector<64x128xf32>
    %cst_31 = arith.constant 1.000000e+00 : f32
    %221 = vector.broadcast %cst_31 : f32 to vector<64x128xf32>
    %222 = arith.addf %221, %220 : vector<64x128xf32>
    %223 = arith.divf %221, %222 : vector<64x128xf32>
    %224 = vector.extract_strided_slice %217 {offsets = [64, 0], sizes = [32, 128], strides = [1, 1]} : vector<128x128xf32> to vector<32x128xf32>
    %225 = math.tanh %224 : vector<32x128xf32>
    %226 = vector.extract_strided_slice %217 {offsets = [96, 0], sizes = [32, 128], strides = [1, 1]} : vector<128x128xf32> to vector<32x128xf32>
    %227 = arith.negf %226 : vector<32x128xf32>
    %228 = math.exp %227 : vector<32x128xf32>
    %cst_32 = arith.constant 1.000000e+00 : f32
    %229 = vector.broadcast %cst_32 : f32 to vector<32x128xf32>
    %230 = arith.addf %229, %228 : vector<32x128xf32>
    %231 = arith.divf %229, %230 : vector<32x128xf32>
    %232 = vector.extract_strided_slice %223 {offsets = [0, 0], sizes = [32, 128], strides = [1, 1]} : vector<64x128xf32> to vector<32x128xf32>
    %233 = vector.extract_strided_slice %223 {offsets = [32, 0], sizes = [32, 128], strides = [1, 1]} : vector<64x128xf32> to vector<32x128xf32>
    %234 = arith.mulf %233, %207 : vector<32x128xf32>
    %235 = arith.mulf %232, %225 : vector<32x128xf32>
    %236 = arith.addf %234, %235 : vector<32x128xf32>
    %237 = math.tanh %236 : vector<32x128xf32>
    %238 = arith.mulf %231, %237 : vector<32x128xf32>
    %c0_33 = arith.constant 0 : index
    %c0_34 = arith.constant 0 : index
    %239 = vector.load %arg5[%c0_33, %c0_34] : memref<1x32xf32, #tpu.memory_space<vmem>>, vector<1x32xf32>
    %cst_35 = arith.constant dense<0.000000e+00> : vector<1x128xf32>
    %240 = tpu.matmul %239, %238, %cst_35 {dimension_numbers = #tpu.dot_dimension_numbers<[1], [0], [0], [1], [0, 0, 1, 1], [], []>} : vector<1x32xf32>, vector<32x128xf32>, vector<1x128xf32> -> vector<1x128xf32>
    %c0_36 = arith.constant 0 : index
    %c0_37 = arith.constant 0 : index
    %241 = vector.load %arg6[%c0_36, %c0_37] : memref<1x1xf32, #tpu.memory_space<vmem>>, vector<1x1xf32>
    %242 = vector.broadcast %241 : vector<1x1xf32> to vector<1x128xf32>
    %243 = arith.addf %240, %242 : vector<1x128xf32>
    %c0_38 = arith.constant 0 : index
    %c0_39 = arith.constant 0 : index
    %c0_40 = arith.constant 0 : index
    %244 = vector.load %arg7[%c0_38, %c0_39, %c0_40] : memref<1x1x128xf32, #tpu.memory_space<vmem>>, vector<1x1x128xf32>
    %245 = vector.shape_cast %244 : vector<1x1x128xf32> to vector<1x128xf32>
    %246 = vector.shape_cast %243 : vector<1x128xf32> to vector<1x1x128xf32>
    tpu.vector_store %arg7[%c0_38, %c0_39, %c0_40], %246 {strides = array<i32>} : memref<1x1x128xf32, #tpu.memory_space<vmem>>, vector<1x1x128xf32>,
    return
  }
  func.func @transform_0(%arg0: i32) -> (i32, i32, i32) {
    %c0_i32 = arith.constant 0 : i32
    %c0_i32_0 = arith.constant 0 : i32
    %c0_i32_1 = arith.constant 0 : i32
    return %arg0, %c0_i32, %c0_i32_0 : i32, i32, i32
  }
  func.func @transform_1(%arg0: i32) -> (i32, i32) {
    %c0_i32 = arith.constant 0 : i32
    %c0_i32_0 = arith.constant 0 : i32
    %c0_i32_1 = arith.constant 0 : i32
    return %c0_i32, %c0_i32_0 : i32, i32
  }
  func.func @transform_2(%arg0: i32) -> (i32, i32) {
    %c0_i32 = arith.constant 0 : i32
    %c0_i32_0 = arith.constant 0 : i32
    %c0_i32_1 = arith.constant 0 : i32
    return %c0_i32, %c0_i32_0 : i32, i32
  }
  func.func @transform_3(%arg0: i32) -> (i32, i32) {
    %c0_i32 = arith.constant 0 : i32
    %c0_i32_0 = arith.constant 0 : i32
    %c0_i32_1 = arith.constant 0 : i32
    return %c0_i32, %c0_i32_0 : i32, i32
  }
  func.func @transform_4(%arg0: i32) -> (i32, i32) {
    %c0_i32 = arith.constant 0 : i32
    %c0_i32_0 = arith.constant 0 : i32
    %c0_i32_1 = arith.constant 0 : i32
    return %c0_i32, %c0_i32_0 : i32, i32
  }
  func.func @transform_5(%arg0: i32) -> (i32, i32) {
    %c0_i32 = arith.constant 0 : i32
    %c0_i32_0 = arith.constant 0 : i32
    %c0_i32_1 = arith.constant 0 : i32
    return %c0_i32, %c0_i32_0 : i32, i32
  }
  func.func @transform_6(%arg0: i32) -> (i32, i32, i32) {
    %c0_i32 = arith.constant 0 : i32
    %c0_i32_0 = arith.constant 0 : i32
    %c0_i32_1 = arith.constant 0 : i32
    return %arg0, %c0_i32, %c0_i32_0 : i32, i32, i32
  }
}

</mosaic_0001>

<llo_original>
// kernel: tpu_custom_call.1
$region0: #{tpu_custom_call.1}
  #allocation0 [shape = 'u32[]', space=smem, size = 0x4, offset = 0x4, fixed_abs, tag = 'smem constant byte address 0x4 - core index']
  #allocation1 [shape = 'u32[144,128]{1,0:T(1,128)}', space=vmem, size = 0x12000, scoped, tag = 'internal scratch']
  #allocation2 [shape = 'f32[1,1]{1,0:T(1,128)S(1)}', space=vmem, size = 0x200, scoped, tag = 'scoped memory for tpu_custom_call.1']
  %s0 = inlined_call_operand.vmem [shape: f32[1,8,128], index: 0, kind: input, shape index: {}]
  %s1 = inlined_call_operand.vmem [shape: f32[128,1], index: 1, kind: input, shape index: {}]
  %s2 = inlined_call_operand.vmem [shape: f32[128,32], index: 2, kind: input, shape index: {}]
  %s3 = inlined_call_operand.vmem [shape: f32[128,1], index: 3, kind: input, shape index: {}]
  %s4 = inlined_call_operand.vmem [shape: f32[1,32], index: 4, kind: input, shape index: {}]
  %s5 = inlined_call_operand.<no memory space> [shape: f32[1,1], index: 5, kind: input, shape index: {}]
  %s6 = inlined_call_operand.hbm [shape: f32[1,1,128], index: 6, kind: output, shape index: {}]
  %s7 = sld [smem:[#allocation0]]
  $region34: #{tpu_custom_call.1} parent=0
    _
  %s9 = ssub.s32 1, %s7
  %s10 = scalar_select 0, %s9, %s7
  %v11 = vstv %s5
  %12 = vst [vmem:[#allocation2] sm:$0x1] %v11
  $region1: #{tpu_custom_call.1} parent=0
    #allocation3 [shape = 'u8[512]{0}', space=vmem, size = 0x400, scoped, tag = 'output window, operand 0, single buffered']
    #allocation4 [shape = 's32[1]{0}', space=sflag, size = 0x4, scoped, tag = 'scoped memory for tpu_custom_call.1']
    %13 = vsyncpa [#allocation4], 0
    // Predicated region
    $region2: #{tpu_custom_call.1} parent=1 // pred_check
      _
    $region3: #{tpu_custom_call.1} parent=1 // pred_check_branch
      %15 = sbr.rel (0) target = $region5
    $region4: #{tpu_custom_call.1} parent=1 // pred_region
      _
    $region5: #{tpu_custom_call.1} parent=1 // pred_fallthru
      _
    // Predicated region
    $region6: #{tpu_custom_call.1} parent=1 // pred_check
      _
    $region7: #{tpu_custom_call.1} parent=1 // pred_check_branch
      %17 = sbr.rel (0) target = $region9
    $region8: #{tpu_custom_call.1} parent=1 // pred_region
      _
    $region9: #{tpu_custom_call.1} parent=1 // pred_fallthru
      _
    // Predicated region
    $region10: #{tpu_custom_call.1} parent=1 // pred_check
      _
    $region11: #{tpu_custom_call.1} parent=1 // pred_check_branch
      %19 = sbr.rel (0) target = $region13
    $region12: #{tpu_custom_call.1} parent=1 // pred_region
      _
    $region13: #{tpu_custom_call.1} parent=1 // pred_fallthru
      _
    // Predicated region
    $region14: #{tpu_custom_call.1} parent=1 // pred_check
      _
    $region15: #{tpu_custom_call.1} parent=1 // pred_check_branch
      %21 = sbr.rel (0) target = $region17
    $region16: #{tpu_custom_call.1} parent=1 // pred_region
      _
    $region17: #{tpu_custom_call.1} parent=1 // pred_fallthru
      _
    // Predicated region
    $region18: #{tpu_custom_call.1} parent=1 // pred_check
      _
    $region19: #{tpu_custom_call.1} parent=1 // pred_check_branch
      %23 = sbr.rel (0) target = $region21
    $region20: #{tpu_custom_call.1} parent=1 // pred_region
      _
    $region21: #{tpu_custom_call.1} parent=1 // pred_fallthru
      _
    // Predicated region
    $region22: #{tpu_custom_call.1} parent=1 // pred_check
      _
    $region23: #{tpu_custom_call.1} parent=1 // pred_check_branch
      %25 = sbr.rel (0) target = $region25
    $region24: #{tpu_custom_call.1} parent=1 // pred_region
      _
    $region25: #{tpu_custom_call.1} parent=1 // pred_fallthru
      _
    %v26 = vld [vmem:[%s0] sm:$0xff]
    %v27 = vld [vmem:[%s1] sm:$0xff]
    %v28 = vld [vmem:[%s1 + $0x8] sm:$0xff]
    %v29 = vld [vmem:[%s1 + $0x10] sm:$0xff]
    %v30 = vld [vmem:[%s1 + $0x18] sm:$0xff]
    %v31 = vld [vmem:[%s1 + $0x20] sm:$0xff]
    %v32 = vld [vmem:[%s1 + $0x28] sm:$0xff]
    %v33 = vld [vmem:[%s1 + $0x30] sm:$0xff]
    %v34 = vld [vmem:[%s1 + $0x38] sm:$0xff]
    %v35 = vld [vmem:[%s1 + $0x40] sm:$0xff]
    %v36 = vld [vmem:[%s1 + $0x48] sm:$0xff]
    %v37 = vld [vmem:[%s1 + $0x50] sm:$0xff]
    %v38 = vld [vmem:[%s1 + $0x58] sm:$0xff]
    %v39 = vld [vmem:[%s1 + $0x60] sm:$0xff]
    %v40 = vld [vmem:[%s1 + $0x68] sm:$0xff]
    %v41 = vld [vmem:[%s1 + $0x70] sm:$0xff]
    %v42 = vld [vmem:[%s1 + $0x78] sm:$0xff]
    %v43 = vld [vmem:[%s2] sm:$0xff]
    %v44 = vld [vmem:[%s2 + $0x8] sm:$0xff]
    %v45 = vld [vmem:[%s2 + $0x10] sm:$0xff]
    %v46 = vld [vmem:[%s2 + $0x18] sm:$0xff]
    %v47 = vld [vmem:[%s2 + $0x20] sm:$0xff]
    %v48 = vld [vmem:[%s2 + $0x28] sm:$0xff]
    %v49 = vld [vmem:[%s2 + $0x30] sm:$0xff]
    %v50 = vld [vmem:[%s2 + $0x38] sm:$0xff]
    %v51 = vld [vmem:[%s2 + $0x40] sm:$0xff]
    %v52 = vld [vmem:[%s2 + $0x48] sm:$0xff]
    %v53 = vld [vmem:[%s2 + $0x50] sm:$0xff]
    %v54 = vld [vmem:[%s2 + $0x58] sm:$0xff]
    %v55 = vld [vmem:[%s2 + $0x60] sm:$0xff]
    %v56 = vld [vmem:[%s2 + $0x68] sm:$0xff]
    %v57 = vld [vmem:[%s2 + $0x70] sm:$0xff]
    %v58 = vld [vmem:[%s2 + $0x78] sm:$0xff]
    %v59 = vld [vmem:[%s3] sm:$0xff]
    %v60 = vld [vmem:[%s3 + $0x8] sm:$0xff]
    %v61 = vld [vmem:[%s3 + $0x10] sm:$0xff]
    %v62 = vld [vmem:[%s3 + $0x18] sm:$0xff]
    %v63 = vld [vmem:[%s3 + $0x20] sm:$0xff]
    %v64 = vld [vmem:[%s3 + $0x28] sm:$0xff]
    %v65 = vld [vmem:[%s3 + $0x30] sm:$0xff]
    %v66 = vld [vmem:[%s3 + $0x38] sm:$0xff]
    %v67 = vld [vmem:[%s3 + $0x40] sm:$0xff]
    %v68 = vld [vmem:[%s3 + $0x48] sm:$0xff]
    %v69 = vld [vmem:[%s3 + $0x50] sm:$0xff]
    %v70 = vld [vmem:[%s3 + $0x58] sm:$0xff]
    %v71 = vld [vmem:[%s3 + $0x60] sm:$0xff]
    %v72 = vld [vmem:[%s3 + $0x68] sm:$0xff]
    %v73 = vld [vmem:[%s3 + $0x70] sm:$0xff]
    %v74 = vld [vmem:[%s3 + $0x78] sm:$0xff]
    %v75 = vlaneseq
    %v76 = vshrl.u32 %v75, 7
    %v77 = vsub.s32 0, %v76
    %v78 = vrot.slane %v26, %v77
    %80 = vset.pattern.permute.xlu0 0
    %81 = vperm.xlu0 %80, %v27
    %v82 = vpop.permute.xlu0 %81
    %85 = vset.pattern.permute.xlu0 0
    %86 = vperm.xlu0 %85, %v28
    %v87 = vpop.permute.xlu0 %86
    %90 = vset.pattern.permute.xlu0 0
    %91 = vperm.xlu0 %90, %v29
    %v92 = vpop.permute.xlu0 %91
    %95 = vset.pattern.permute.xlu0 0
    %96 = vperm.xlu0 %95, %v30
    %v97 = vpop.permute.xlu0 %96
    %100 = vset.pattern.permute.xlu0 0
    %101 = vperm.xlu0 %100, %v31
    %v102 = vpop.permute.xlu0 %101
    %105 = vset.pattern.permute.xlu0 0
    %106 = vperm.xlu0 %105, %v32
    %v107 = vpop.permute.xlu0 %106
    %110 = vset.pattern.permute.xlu0 0
    %111 = vperm.xlu0 %110, %v33
    %v112 = vpop.permute.xlu0 %111
    %115 = vset.pattern.permute.xlu0 0
    %116 = vperm.xlu0 %115, %v34
    %v117 = vpop.permute.xlu0 %116
    %120 = vset.pattern.permute.xlu0 0
    %121 = vperm.xlu0 %120, %v35
    %v122 = vpop.permute.xlu0 %121
    %125 = vset.pattern.permute.xlu0 0
    %126 = vperm.xlu0 %125, %v36
    %v127 = vpop.permute.xlu0 %126
    %130 = vset.pattern.permute.xlu0 0
    %131 = vperm.xlu0 %130, %v37
    %v132 = vpop.permute.xlu0 %131
    %135 = vset.pattern.permute.xlu0 0
    %136 = vperm.xlu0 %135, %v38
    %v137 = vpop.permute.xlu0 %136
    %140 = vset.pattern.permute.xlu0 0
    %141 = vperm.xlu0 %140, %v39
    %v142 = vpop.permute.xlu0 %141
    %145 = vset.pattern.permute.xlu0 0
    %146 = vperm.xlu0 %145, %v40
    %v147 = vpop.permute.xlu0 %146
    %150 = vset.pattern.permute.xlu0 0
    %151 = vperm.xlu0 %150, %v41
    %v152 = vpop.permute.xlu0 %151
    %155 = vset.pattern.permute.xlu0 0
    %156 = vperm.xlu0 %155, %v42
    %v157 = vpop.permute.xlu0 %156
    %v159 = vmul.f32 %v78, %v82
    %v160 = vmul.f32 %v78, %v87
    %v161 = vmul.f32 %v78, %v92
    %v162 = vmul.f32 %v78, %v97
    %v163 = vmul.f32 %v78, %v102
    %v164 = vmul.f32 %v78, %v107
    %v165 = vmul.f32 %v78, %v112
    %v166 = vmul.f32 %v78, %v117
    %v167 = vmul.f32 %v78, %v122
    %v168 = vmul.f32 %v78, %v127
    %v169 = vmul.f32 %v78, %v132
    %v170 = vmul.f32 %v78, %v137
    %v171 = vmul.f32 %v78, %v142
    %v172 = vmul.f32 %v78, %v147
    %v173 = vmul.f32 %v78, %v152
    %v174 = vmul.f32 %v78, %v157
    %176 = vset.pattern.permute.xlu0 0
    %177 = vperm.xlu0 %176, %v59
    %v178 = vpop.permute.xlu0 %177
    %181 = vset.pattern.permute.xlu0 0
    %182 = vperm.xlu0 %181, %v60
    %v183 = vpop.permute.xlu0 %182
    %186 = vset.pattern.permute.xlu0 0
    %187 = vperm.xlu0 %186, %v61
    %v188 = vpop.permute.xlu0 %187
    %191 = vset.pattern.permute.xlu0 0
    %192 = vperm.xlu0 %191, %v62
    %v193 = vpop.permute.xlu0 %192
    %196 = vset.pattern.permute.xlu0 0
    %197 = vperm.xlu0 %196, %v63
    %v198 = vpop.permute.xlu0 %197
    %201 = vset.pattern.permute.xlu0 0
    %202 = vperm.xlu0 %201, %v64
    %v203 = vpop.permute.xlu0 %202
    %206 = vset.pattern.permute.xlu0 0
    %207 = vperm.xlu0 %206, %v65
    %v208 = vpop.permute.xlu0 %207
    %211 = vset.pattern.permute.xlu0 0
    %212 = vperm.xlu0 %211, %v66
    %v213 = vpop.permute.xlu0 %212
    %216 = vset.pattern.permute.xlu0 0
    %217 = vperm.xlu0 %216, %v67
    %v218 = vpop.permute.xlu0 %217
    %221 = vset.pattern.permute.xlu0 0
    %222 = vperm.xlu0 %221, %v68
    %v223 = vpop.permute.xlu0 %222
    %226 = vset.pattern.permute.xlu0 0
    %227 = vperm.xlu0 %226, %v69
    %v228 = vpop.permute.xlu0 %227
    %231 = vset.pattern.permute.xlu0 0
    %232 = vperm.xlu0 %231, %v70
    %v233 = vpop.permute.xlu0 %232
    %236 = vset.pattern.permute.xlu0 0
    %237 = vperm.xlu0 %236, %v71
    %v238 = vpop.permute.xlu0 %237
    %241 = vset.pattern.permute.xlu0 0
    %242 = vperm.xlu0 %241, %v72
    %v243 = vpop.permute.xlu0 %242
    %246 = vset.pattern.permute.xlu0 0
    %247 = vperm.xlu0 %246, %v73
    %v248 = vpop.permute.xlu0 %247
    %251 = vset.pattern.permute.xlu0 0
    %252 = vperm.xlu0 %251, %v74
    %v253 = vpop.permute.xlu0 %252
    %v255 = vadd.f32 %v159, %v178
    %v256 = vadd.f32 %v160, %v183
    %v257 = vadd.f32 %v161, %v188
    %v258 = vadd.f32 %v162, %v193
    %v259 = vadd.f32 %v163, %v198
    %v260 = vadd.f32 %v164, %v203
    %v261 = vadd.f32 %v165, %v208
    %v262 = vadd.f32 %v166, %v213
    %v263 = vadd.f32 %v167, %v218
    %v264 = vadd.f32 %v168, %v223
    %v265 = vadd.f32 %v169, %v228
    %v266 = vadd.f32 %v170, %v233
    %v267 = vadd.f32 %v171, %v238
    %v268 = vadd.f32 %v172, %v243
    %v269 = vadd.f32 %v173, %v248
    %v270 = vadd.f32 %v174, %v253
    %vm271 = vcmask 261120
    %v273 = vsel %vm271, %v43, 0
    %v276 = vsel %vm271, %v44, 0
    %v279 = vsel %vm271, %v45, 0
    %v282 = vsel %vm271, %v46, 0
    %v285 = vsel %vm271, %v47, 0
    %v288 = vsel %vm271, %v48, 0
    %v291 = vsel %vm271, %v49, 0
    %v294 = vsel %vm271, %v50, 0
    %v297 = vsel %vm271, %v51, 0
    %v300 = vsel %vm271, %v52, 0
    %v303 = vsel %vm271, %v53, 0
    %v306 = vsel %vm271, %v54, 0
    %v309 = vsel %vm271, %v55, 0
    %v312 = vsel %vm271, %v56, 0
    %v315 = vsel %vm271, %v57, 0
    %v318 = vsel %vm271, %v58, 0
    %320 = vmatprep.subr.mxu0 0.0
    %321 = vmatpush1.msra.mxu0 0.0
    %322 = vmatprep.subr.mxu0 0.0
    %323 = vmatpush1.msra.mxu0 0.0
    %324 = vmatprep.subr.mxu0 0.0
    %325 = vmatpush1.msra.mxu0 0.0
    %326 = vmatprep.subr.mxu0 0.0
    %327 = vmatpush1.msra.mxu0 0.0
    %328 = vmatprep.subr.mxu0 0.0
    %329 = vmatpush1.msra.mxu0 0.0
    %330 = vmatprep.subr.mxu0 0.0
    %331 = vmatpush1.msra.mxu0 0.0
    %332 = vmatprep.subr.mxu0 0.0
    %333 = vmatpush1.msra.mxu0 0.0
    %334 = vmatprep.subr.mxu0 0.0
    %335 = vmatpush1.msra.mxu0 0.0
    %336 = vmatprep.subr.mxu0 0.0
    %337 = vmatpush1.msra.mxu0 0.0
    %338 = vmatprep.subr.mxu0 0.0
    %339 = vmatpush1.msra.mxu0 0.0
    %340 = vmatprep.subr.mxu0 0.0
    %341 = vmatpush1.msra.mxu0 0.0
    %342 = vmatprep.subr.mxu0 0.0
    %343 = vmatpush1.msra.mxu0 0.0
    %344 = vmatprep.subr.mxu0 0.0
    %345 = vmatpush1.msra.mxu0 0.0
    %346 = vmatprep.subr.mxu0 0.0
    %347 = vmatpush1.msra.mxu0 0.0
    %348 = vmatprep.subr.mxu0 0.0
    %349 = vmatpush1.msra.mxu0 0.0
    %350 = vmatprep.subr.mxu0 0.0
    %351 = vmatpush1.msra.mxu0 0.0
    %352 = vmatprep.subr.mxu0 0.0
    %353 = vmatpush1.msra.mxu0 0.0
    %354 = vmatprep.subr.mxu0 0.0
    %355 = vmatpush1.msra.mxu0 0.0
    %356 = vmatprep.subr.mxu0 0.0
    %357 = vmatpush1.msra.mxu0 0.0
    %358 = vmatprep.subr.mxu0 0.0
    %359 = vmatpush1.msra.mxu0 0.0
    %360 = vmatprep.subr.mxu0 0.0
    %361 = vmatpush1.msra.mxu0 0.0
    %362 = vmatprep.subr.mxu0 0.0
    %363 = vmatpush1.msra.mxu0 0.0
    %364 = vmatprep.subr.mxu0 0.0
    %365 = vmatpush1.msra.mxu0 0.0
    %366 = vmatprep.subr.mxu0 0.0
    %367 = vmatpush1.msra.mxu0 0.0
    %368 = vmatprep.subr.mxu0 0.0
    %369 = vmatpush1.msra.mxu0 0.0
    %370 = vmatprep.subr.mxu0 0.0
    %371 = vmatpush1.msra.mxu0 0.0
    %372 = vmatprep.subr.mxu0 0.0
    %373 = vmatpush1.msra.mxu0 0.0
    %374 = vmatprep.subr.mxu0 0.0
    %375 = vmatpush1.msra.mxu0 0.0
    %376 = vmatprep.subr.mxu0 0.0
    %377 = vmatpush1.msra.mxu0 0.0
    %378 = vmatprep.subr.mxu0 0.0
    %379 = vmatpush1.msra.mxu0 0.0
    %380 = vmatprep.subr.mxu0 0.0
    %381 = vmatpush1.msra.mxu0 0.0
    %382 = vmatprep.subr.mxu0 0.0
    %383 = vmatpush1.msra.mxu0 0.0
    %384 = vmatprep.mubr.f32.mxu0 0.0
    %385 = vmatmul.mubr.f32.gmra.mrb[0].mxu0 %v273
    %v386 = vpop.f32.mrb[0].mxu0
    %v387 = vadd.f32 0.0, %v386
    %v388 = vpop.f32.mrb[0].mxu0
    %389 = vmatprep.mubr.f32.mxu0 0.0
    %390 = vmatmul.mubr.f32.gmra.mrb[0].mxu0 %v276
    %v391 = vpop.f32.mrb[0].mxu0
    %v392 = vadd.f32 0.0, %v391
    %v393 = vpop.f32.mrb[0].mxu0
    %394 = vmatprep.mubr.f32.mxu0 0.0
    %395 = vmatmul.mubr.f32.gmra.mrb[0].mxu0 %v279
    %v396 = vpop.f32.mrb[0].mxu0
    %v397 = vadd.f32 0.0, %v396
    %v398 = vpop.f32.mrb[0].mxu0
    %399 = vmatprep.mubr.f32.mxu0 0.0
    %400 = vmatmul.mubr.f32.gmra.mrb[0].mxu0 %v282
    %v401 = vpop.f32.mrb[0].mxu0
    %v402 = vadd.f32 0.0, %v401
    %v403 = vpop.f32.mrb[0].mxu0
    %404 = vmatprep.mubr.f32.mxu0 0.0
    %405 = vmatmul.mubr.f32.gmra.mrb[0].mxu0 %v285
    %v406 = vpop.f32.mrb[0].mxu0
    %v407 = vadd.f32 0.0, %v406
    %v408 = vpop.f32.mrb[0].mxu0
    %409 = vmatprep.mubr.f32.mxu0 0.0
    %410 = vmatmul.mubr.f32.gmra.mrb[0].mxu0 %v288
    %v411 = vpop.f32.mrb[0].mxu0
    %v412 = vadd.f32 0.0, %v411
    %v413 = vpop.f32.mrb[0].mxu0
    %414 = vmatprep.mubr.f32.mxu0 0.0
    %415 = vmatmul.mubr.f32.gmra.mrb[0].mxu0 %v291
    %v416 = vpop.f32.mrb[0].mxu0
    %v417 = vadd.f32 0.0, %v416
    %v418 = vpop.f32.mrb[0].mxu0
    %419 = vmatprep.mubr.f32.mxu0 0.0
    %420 = vmatmul.mubr.f32.gmra.mrb[0].mxu0 %v294
    %v421 = vpop.f32.mrb[0].mxu0
    %v422 = vadd.f32 0.0, %v421
    %v423 = vpop.f32.mrb[0].mxu0
    %424 = vmatprep.mubr.f32.mxu0 0.0
    %425 = vmatmul.mubr.f32.gmra.mrb[0].mxu0 %v297
    %v426 = vpop.f32.mrb[0].mxu0
    %v427 = vadd.f32 0.0, %v426
    %v428 = vpop.f32.mrb[0].mxu0
    %429 = vmatprep.mubr.f32.mxu0 0.0
    %430 = vmatmul.mubr.f32.gmra.mrb[0].mxu0 %v300
    %v431 = vpop.f32.mrb[0].mxu0
    %v432 = vadd.f32 0.0, %v431
    %v433 = vpop.f32.mrb[0].mxu0
    %434 = vmatprep.mubr.f32.mxu0 0.0
    %435 = vmatmul.mubr.f32.gmra.mrb[0].mxu0 %v303
    %v436 = vpop.f32.mrb[0].mxu0
    %v437 = vadd.f32 0.0, %v436
    %v438 = vpop.f32.mrb[0].mxu0
    %439 = vmatprep.mubr.f32.mxu0 0.0
    %440 = vmatmul.mubr.f32.gmra.mrb[0].mxu0 %v306
    %v441 = vpop.f32.mrb[0].mxu0
    %v442 = vadd.f32 0.0, %v441
    %v443 = vpop.f32.mrb[0].mxu0
    %444 = vmatprep.mubr.f32.mxu0 0.0
    %445 = vmatmul.mubr.f32.gmra.mrb[0].mxu0 %v309
    %v446 = vpop.f32.mrb[0].mxu0
    %v447 = vadd.f32 0.0, %v446
    %v448 = vpop.f32.mrb[0].mxu0
    %449 = vmatprep.mubr.f32.mxu0 0.0
    %450 = vmatmul.mubr.f32.gmra.mrb[0].mxu0 %v312
    %v451 = vpop.f32.mrb[0].mxu0
    %v452 = vadd.f32 0.0, %v451
    %v453 = vpop.f32.mrb[0].mxu0
    %454 = vmatprep.mubr.f32.mxu0 0.0
    %455 = vmatmul.mubr.f32.gmra.mrb[0].mxu0 %v315
    %v456 = vpop.f32.mrb[0].mxu0
    %v457 = vadd.f32 0.0, %v456
    %v458 = vpop.f32.mrb[0].mxu0
    %459 = vmatprep.mubr.f32.mxu0 0.0
    %460 = vmatmul.mubr.f32.gmra.mrb[0].mxu0 %v318
    %v461 = vpop.f32.mrb[0].mxu0
    %v462 = vadd.f32 0.0, %v461
    %v463 = vpop.f32.mrb[0].mxu0
    %464 = vdwg.mxu0
    %v465 = vadd.f32 %v255, %v387
    %v466 = vadd.f32 %v256, %v392
    %v467 = vadd.f32 %v257, %v397
    %v468 = vadd.f32 %v258, %v402
    %v469 = vadd.f32 %v259, %v407
    %v470 = vadd.f32 %v260, %v412
    %v471 = vadd.f32 %v261, %v417
    %v472 = vadd.f32 %v262, %v422
    %v473 = vadd.f32 %v263, %v427
    %v474 = vadd.f32 %v264, %v432
    %v475 = vadd.f32 %v265, %v437
    %v476 = vadd.f32 %v266, %v442
    %v477 = vadd.f32 %v267, %v447
    %v478 = vadd.f32 %v268, %v452
    %v479 = vadd.f32 %v269, %v457
    %v480 = vadd.f32 %v270, %v462
    %v481 = vxor.u32 %v465, 2147483648
    %v482 = vxor.u32 %v466, 2147483648
    %v483 = vxor.u32 %v467, 2147483648
    %v484 = vxor.u32 %v468, 2147483648
    %v485 = vxor.u32 %v469, 2147483648
    %v486 = vxor.u32 %v470, 2147483648
    %v487 = vxor.u32 %v471, 2147483648
    %v488 = vxor.u32 %v472, 2147483648
    %v489 = vmul.f32 %v481, 1.442695
    %v490 = vpow.pop %v489
    %v491 = vmul.f32 %v482, 1.442695
    %v492 = vpow.pop %v491
    %v493 = vmul.f32 %v483, 1.442695
    %v494 = vpow.pop %v493
    %v495 = vmul.f32 %v484, 1.442695
    %v496 = vpow.pop %v495
    %v497 = vmul.f32 %v485, 1.442695
    %v498 = vpow.pop %v497
    %v499 = vmul.f32 %v486, 1.442695
    %v500 = vpow.pop %v499
    %v501 = vmul.f32 %v487, 1.442695
    %v502 = vpow.pop %v501
    %v503 = vmul.f32 %v488, 1.442695
    %v504 = vpow.pop %v503
    %v505 = vadd.f32 %v490, 1.0
    %v506 = vadd.f32 %v492, 1.0
    %v507 = vadd.f32 %v494, 1.0
    %v508 = vadd.f32 %v496, 1.0
    %v509 = vadd.f32 %v498, 1.0
    %v510 = vadd.f32 %v500, 1.0
    %v511 = vadd.f32 %v502, 1.0
    %v512 = vadd.f32 %v504, 1.0
    %v513 = vrcp.pop %v505
    %v514 = vmul.f32 1.0, %v513
    %v515 = vrcp.pop %v506
    %v516 = vmul.f32 1.0, %v515
    %v517 = vrcp.pop %v507
    %v518 = vmul.f32 1.0, %v517
    %v519 = vrcp.pop %v508
    %v520 = vmul.f32 1.0, %v519
    %v521 = vrcp.pop %v509
    %v522 = vmul.f32 1.0, %v521
    %v523 = vrcp.pop %v510
    %v524 = vmul.f32 1.0, %v523
    %v525 = vrcp.pop %v511
    %v526 = vmul.f32 1.0, %v525
    %v527 = vrcp.pop %v512
    %v528 = vmul.f32 1.0, %v527
    %v529 = vtanh.pop %v473
    %v530 = vtanh.pop %v474
    %v531 = vtanh.pop %v475
    %v532 = vtanh.pop %v476
    %v533 = vxor.u32 %v477, 2147483648
    %v534 = vxor.u32 %v478, 2147483648
    %v535 = vxor.u32 %v479, 2147483648
    %v536 = vxor.u32 %v480, 2147483648
    %v537 = vmul.f32 %v533, 1.442695
    %v538 = vpow.pop %v537
    %v539 = vmul.f32 %v534, 1.442695
    %v540 = vpow.pop %v539
    %v541 = vmul.f32 %v535, 1.442695
    %v542 = vpow.pop %v541
    %v543 = vmul.f32 %v536, 1.442695
    %v544 = vpow.pop %v543
    %v545 = vadd.f32 %v538, 1.0
    %v546 = vadd.f32 %v540, 1.0
    %v547 = vadd.f32 %v542, 1.0
    %v548 = vadd.f32 %v544, 1.0
    %v549 = vrcp.pop %v545
    %v550 = vmul.f32 1.0, %v549
    %v551 = vrcp.pop %v546
    %v552 = vmul.f32 1.0, %v551
    %v553 = vrcp.pop %v547
    %v554 = vmul.f32 1.0, %v553
    %v555 = vrcp.pop %v548
    %v556 = vmul.f32 1.0, %v555
    %v557 = vmul.f32 %v522, 0.0
    %v558 = vmul.f32 %v524, 0.0
    %v559 = vmul.f32 %v526, 0.0
    %v560 = vmul.f32 %v528, 0.0
    %v561 = vmul.f32 %v514, %v529
    %v562 = vmul.f32 %v516, %v530
    %v563 = vmul.f32 %v518, %v531
    %v564 = vmul.f32 %v520, %v532
    %v565 = vadd.f32 %v557, %v561
    %v566 = vadd.f32 %v558, %v562
    %v567 = vadd.f32 %v559, %v563
    %v568 = vadd.f32 %v560, %v564
    %v569 = vtanh.pop %v565
    %v570 = vtanh.pop %v566
    %v571 = vtanh.pop %v567
    %v572 = vtanh.pop %v568
    %v573 = vmul.f32 %v550, %v569
    %v574 = vmul.f32 %v552, %v570
    %v575 = vmul.f32 %v554, %v571
    %v576 = vmul.f32 %v556, %v572
    %v577 = vlaneseq
    %v578 = vshrl.u32 %v577, 7
    %v579 = vsub.s32 1, %v578
    %v580 = vrot.slane %v26, %v579
    %v581 = vmul.f32 %v580, %v82
    %v582 = vmul.f32 %v580, %v87
    %v583 = vmul.f32 %v580, %v92
    %v584 = vmul.f32 %v580, %v97
    %v585 = vmul.f32 %v580, %v102
    %v586 = vmul.f32 %v580, %v107
    %v587 = vmul.f32 %v580, %v112
    %v588 = vmul.f32 %v580, %v117
    %v589 = vmul.f32 %v580, %v122
    %v590 = vmul.f32 %v580, %v127
    %v591 = vmul.f32 %v580, %v132
    %v592 = vmul.f32 %v580, %v137
    %v593 = vmul.f32 %v580, %v142
    %v594 = vmul.f32 %v580, %v147
    %v595 = vmul.f32 %v580, %v152
    %v596 = vmul.f32 %v580, %v157
    %v597 = vadd.f32 %v581, %v178
    %v598 = vadd.f32 %v582, %v183
    %v599 = vadd.f32 %v583, %v188
    %v600 = vadd.f32 %v584, %v193
    %v601 = vadd.f32 %v585, %v198
    %v602 = vadd.f32 %v586, %v203
    %v603 = vadd.f32 %v587, %v208
    %v604 = vadd.f32 %v588, %v213
    %v605 = vadd.f32 %v589, %v218
    %v606 = vadd.f32 %v590, %v223
    %v607 = vadd.f32 %v591, %v228
    %v608 = vadd.f32 %v592, %v233
    %v609 = vadd.f32 %v593, %v238
    %v610 = vadd.f32 %v594, %v243
    %v611 = vadd.f32 %v595, %v248
    %v612 = vadd.f32 %v596, %v253
    %613 = vmatprep.subr.mxu0 0.0
    %614 = vmatpush1.msra.mxu0 %v573
    %615 = vmatprep.subr.mxu0 0.0
    %616 = vmatpush1.msra.mxu0 %v574
    %617 = vmatprep.subr.mxu0 0.0
    %618 = vmatpush1.msra.mxu0 %v575
    %619 = vmatprep.subr.mxu0 0.0
    %620 = vmatpush1.msra.mxu0 %v576
    %621 = vmatprep.subr.mxu0 0.0
    %622 = vmatpush1.msra.mxu0 0.0
    %623 = vmatprep.subr.mxu0 0.0
    %624 = vmatpush1.msra.mxu0 0.0
    %625 = vmatprep.subr.mxu0 0.0
    %626 = vmatpush1.msra.mxu0 0.0
    %627 = vmatprep.subr.mxu0 0.0
    %628 = vmatpush1.msra.mxu0 0.0
    %629 = vmatprep.subr.mxu0 0.0
    %630 = vmatpush1.msra.mxu0 0.0
    %631 = vmatprep.subr.mxu0 0.0
    %632 = vmatpush1.msra.mxu0 0.0
    %633 = vmatprep.subr.mxu0 0.0
    %634 = vmatpush1.msra.mxu0 0.0
    %635 = vmatprep.subr.mxu0 0.0
    %636 = vmatpush1.msra.mxu0 0.0
    %637 = vmatprep.subr.mxu0 0.0
    %638 = vmatpush1.msra.mxu0 0.0
    %639 = vmatprep.subr.mxu0 0.0
    %640 = vmatpush1.msra.mxu0 0.0
    %641 = vmatprep.subr.mxu0 0.0
    %642 = vmatpush1.msra.mxu0 0.0
    %643 = vmatprep.subr.mxu0 0.0
    %644 = vmatpush1.msra.mxu0 0.0
    %645 = vmatprep.subr.mxu0 0.0
    %646 = vmatpush1.msra.mxu0 0.0
    %647 = vmatprep.subr.mxu0 0.0
    %648 = vmatpush1.msra.mxu0 0.0
    %649 = vmatprep.subr.mxu0 0.0
    %650 = vmatpush1.msra.mxu0 0.0
    %651 = vmatprep.subr.mxu0 0.0
    %652 = vmatpush1.msra.mxu0 0.0
    %653 = vmatprep.subr.mxu0 0.0
    %654 = vmatpush1.msra.mxu0 0.0
    %655 = vmatprep.subr.mxu0 0.0
    %656 = vmatpush1.msra.mxu0 0.0
    %657 = vmatprep.subr.mxu0 0.0
    %658 = vmatpush1.msra.mxu0 0.0
    %659 = vmatprep.subr.mxu0 0.0
    %660 = vmatpush1.msra.mxu0 0.0
    %661 = vmatprep.subr.mxu0 0.0
    %662 = vmatpush1.msra.mxu0 0.0
    %663 = vmatprep.subr.mxu0 0.0
    %664 = vmatpush1.msra.mxu0 0.0
    %665 = vmatprep.subr.mxu0 0.0
    %666 = vmatpush1.msra.mxu0 0.0
    %667 = vmatprep.subr.mxu0 0.0
    %668 = vmatpush1.msra.mxu0 0.0
    %669 = vmatprep.subr.mxu0 0.0
    %670 = vmatpush1.msra.mxu0 0.0
    %671 = vmatprep.subr.mxu0 0.0
    %672 = vmatpush1.msra.mxu0 0.0
    %673 = vmatprep.subr.mxu0 0.0
    %674 = vmatpush1.msra.mxu0 0.0
    %675 = vmatprep.subr.mxu0 0.0
    %676 = vmatpush1.msra.mxu0 0.0
    %677 = vmatprep.mubr.f32.mxu0 0.0
    %678 = vmatmul.mubr.f32.gmra.mrb[0].mxu0 %v273
    %v679 = vpop.f32.mrb[0].mxu0
    %v680 = vadd.f32 0.0, %v679
    %v681 = vpop.f32.mrb[0].mxu0
    %682 = vmatprep.mubr.f32.mxu0 0.0
    %683 = vmatmul.mubr.f32.gmra.mrb[0].mxu0 %v276
    %v684 = vpop.f32.mrb[0].mxu0
    %v685 = vadd.f32 0.0, %v684
    %v686 = vpop.f32.mrb[0].mxu0
    %687 = vmatprep.mubr.f32.mxu0 0.0
    %688 = vmatmul.mubr.f32.gmra.mrb[0].mxu0 %v279
    %v689 = vpop.f32.mrb[0].mxu0
    %v690 = vadd.f32 0.0, %v689
    %v691 = vpop.f32.mrb[0].mxu0
    %692 = vmatprep.mubr.f32.mxu0 0.0
    %693 = vmatmul.mubr.f32.gmra.mrb[0].mxu0 %v282
    %v694 = vpop.f32.mrb[0].mxu0
    %v695 = vadd.f32 0.0, %v694
    %v696 = vpop.f32.mrb[0].mxu0
    %697 = vmatprep.mubr.f32.mxu0 0.0
    %698 = vmatmul.mubr.f32.gmra.mrb[0].mxu0 %v285
    %v699 = vpop.f32.mrb[0].mxu0
    %v700 = vadd.f32 0.0, %v699
    %v701 = vpop.f32.mrb[0].mxu0
    %702 = vmatprep.mubr.f32.mxu0 0.0
    %703 = vmatmul.mubr.f32.gmra.mrb[0].mxu0 %v288
    %v704 = vpop.f32.mrb[0].mxu0
    %v705 = vadd.f32 0.0, %v704
    %v706 = vpop.f32.mrb[0].mxu0
    %707 = vmatprep.mubr.f32.mxu0 0.0
    %708 = vmatmul.mubr.f32.gmra.mrb[0].mxu0 %v291
    %v709 = vpop.f32.mrb[0].mxu0
    %v710 = vadd.f32 0.0, %v709
    %v711 = vpop.f32.mrb[0].mxu0
    %712 = vmatprep.mubr.f32.mxu0 0.0
    %713 = vmatmul.mubr.f32.gmra.mrb[0].mxu0 %v294
    %v714 = vpop.f32.mrb[0].mxu0
    %v715 = vadd.f32 0.0, %v714
    %v716 = vpop.f32.mrb[0].mxu0
    %717 = vmatprep.mubr.f32.mxu0 0.0
    %718 = vmatmul.mubr.f32.gmra.mrb[0].mxu0 %v297
    %v719 = vpop.f32.mrb[0].mxu0
    %v720 = vadd.f32 0.0, %v719
    %v721 = vpop.f32.mrb[0].mxu0
    %722 = vmatprep.mubr.f32.mxu0 0.0
    %723 = vmatmul.mubr.f32.gmra.mrb[0].mxu0 %v300
    %v724 = vpop.f32.mrb[0].mxu0
    %v725 = vadd.f32 0.0, %v724
    %v726 = vpop.f32.mrb[0].mxu0
    %727 = vmatprep.mubr.f32.mxu0 0.0
    %728 = vmatmul.mubr.f32.gmra.mrb[0].mxu0 %v303
    %v729 = vpop.f32.mrb[0].mxu0
    %v730 = vadd.f32 0.0, %v729
    %v731 = vpop.f32.mrb[0].mxu0
    %732 = vmatprep.mubr.f32.mxu0 0.0
    %733 = vmatmul.mubr.f32.gmra.mrb[0].mxu0 %v306
    %v734 = vpop.f32.mrb[0].mxu0
    %v735 = vadd.f32 0.0, %v734
    %v736 = vpop.f32.mrb[0].mxu0
    %737 = vmatprep.mubr.f32.mxu0 0.0
    %738 = vmatmul.mubr.f32.gmra.mrb[0].mxu0 %v309
    %v739 = vpop.f32.mrb[0].mxu0
    %v740 = vadd.f32 0.0, %v739
    %v741 = vpop.f32.mrb[0].mxu0
    %742 = vmatprep.mubr.f32.mxu0 0.0
    %743 = vmatmul.mubr.f32.gmra.mrb[0].mxu0 %v312
    %v744 = vpop.f32.mrb[0].mxu0
    %v745 = vadd.f32 0.0, %v744
    %v746 = vpop.f32.mrb[0].mxu0
    %747 = vmatprep.mubr.f32.mxu0 0.0
    %748 = vmatmul.mubr.f32.gmra.mrb[0].mxu0 %v315
    %v749 = vpop.f32.mrb[0].mxu0
    %v750 = vadd.f32 0.0, %v749
    %v751 = vpop.f32.mrb[0].mxu0
    %752 = vmatprep.mubr.f32.mxu0 0.0
    %753 = vmatmul.mubr.f32.gmra.mrb[0].mxu0 %v318
    %v754 = vpop.f32.mrb[0].mxu0
    %v755 = vadd.f32 0.0, %v754
    %v756 = vpop.f32.mrb[0].mxu0
    %757 = vdwg.mxu0
    %v758 = vadd.f32 %v597, %v680
    %v759 = vadd.f32 %v598, %v685
    %v760 = vadd.f32 %v599, %v690
    %v761 = vadd.f32 %v600, %v695
    %v762 = vadd.f32 %v601, %v700
    %v763 = vadd.f32 %v602, %v705
    %v764 = vadd.f32 %v603, %v710
    %v765 = vadd.f32 %v604, %v715
    %v766 = vadd.f32 %v605, %v720
    %v767 = vadd.f32 %v606, %v725
    %v768 = vadd.f32 %v607, %v730
    %v769 = vadd.f32 %v608, %v735
    %v770 = vadd.f32 %v609, %v740
    %v771 = vadd.f32 %v610, %v745
    %v772 = vadd.f32 %v611, %v750
    %v773 = vadd.f32 %v612, %v755
    %v774 = vxor.u32 %v758, 2147483648
    %v775 = vxor.u32 %v759, 2147483648
    %v776 = vxor.u32 %v760, 2147483648
    %v777 = vxor.u32 %v761, 2147483648
    %v778 = vxor.u32 %v762, 2147483648
    %v779 = vxor.u32 %v763, 2147483648
    %v780 = vxor.u32 %v764, 2147483648
    %v781 = vxor.u32 %v765, 2147483648
    %v782 = vmul.f32 %v774, 1.442695
    %v783 = vpow.pop %v782
    %v784 = vmul.f32 %v775, 1.442695
    %v785 = vpow.pop %v784
    %v786 = vmul.f32 %v776, 1.442695
    %v787 = vpow.pop %v786
    %v788 = vmul.f32 %v777, 1.442695
    %v789 = vpow.pop %v788
    %v790 = vmul.f32 %v778, 1.442695
    %v791 = vpow.pop %v790
    %v792 = vmul.f32 %v779, 1.442695
    %v793 = vpow.pop %v792
    %v794 = vmul.f32 %v780, 1.442695
    %v795 = vpow.pop %v794
    %v796 = vmul.f32 %v781, 1.442695
    %v797 = vpow.pop %v796
    %v798 = vadd.f32 %v783, 1.0
    %v799 = vadd.f32 %v785, 1.0
    %v800 = vadd.f32 %v787, 1.0
    %v801 = vadd.f32 %v789, 1.0
    %v802 = vadd.f32 %v791, 1.0
    %v803 = vadd.f32 %v793, 1.0
    %v804 = vadd.f32 %v795, 1.0
    %v805 = vadd.f32 %v797, 1.0
    %v806 = vrcp.pop %v798
    %v807 = vmul.f32 1.0, %v806
    %v808 = vrcp.pop %v799
    %v809 = vmul.f32 1.0, %v808
    %v810 = vrcp.pop %v800
    %v811 = vmul.f32 1.0, %v810
    %v812 = vrcp.pop %v801
    %v813 = vmul.f32 1.0, %v812
    %v814 = vrcp.pop %v802
    %v815 = vmul.f32 1.0, %v814
    %v816 = vrcp.pop %v803
    %v817 = vmul.f32 1.0, %v816
    %v818 = vrcp.pop %v804
    %v819 = vmul.f32 1.0, %v818
    %v820 = vrcp.pop %v805
    %v821 = vmul.f32 1.0, %v820
    %v822 = vtanh.pop %v766
    %v823 = vtanh.pop %v767
    %v824 = vtanh.pop %v768
    %v825 = vtanh.pop %v769
    %v826 = vxor.u32 %v770, 2147483648
    %v827 = vxor.u32 %v771, 2147483648
    %v828 = vxor.u32 %v772, 2147483648
    %v829 = vxor.u32 %v773, 2147483648
    %v830 = vmul.f32 %v826, 1.442695
    %v831 = vpow.pop %v830
    %v832 = vmul.f32 %v827, 1.442695
    %v833 = vpow.pop %v832
    %v834 = vmul.f32 %v828, 1.442695
    %v835 = vpow.pop %v834
    %v836 = vmul.f32 %v829, 1.442695
    %v837 = vpow.pop %v836
    %v838 = vadd.f32 %v831, 1.0
    %v839 = vadd.f32 %v833, 1.0
    %v840 = vadd.f32 %v835, 1.0
    %v841 = vadd.f32 %v837, 1.0
    %v842 = vrcp.pop %v838
    %v843 = vmul.f32 1.0, %v842
    %v844 = vrcp.pop %v839
    %v845 = vmul.f32 1.0, %v844
    %v846 = vrcp.pop %v840
    %v847 = vmul.f32 1.0, %v846
    %v848 = vrcp.pop %v841
    %v849 = vmul.f32 1.0, %v848
    %v850 = vmul.f32 %v815, %v565
    %v851 = vmul.f32 %v817, %v566
    %v852 = vmul.f32 %v819, %v567
    %v853 = vmul.f32 %v821, %v568
    %v854 = vmul.f32 %v807, %v822
    %v855 = vmul.f32 %v809, %v823
    %v856 = vmul.f32 %v811, %v824
    %v857 = vmul.f32 %v813, %v825
    %v858 = vadd.f32 %v850, %v854
    %v859 = vadd.f32 %v851, %v855
    %v860 = vadd.f32 %v852, %v856
    %v861 = vadd.f32 %v853, %v857
    %v862 = vtanh.pop %v858
    %v863 = vtanh.pop %v859
    %v864 = vtanh.pop %v860
    %v865 = vtanh.pop %v861
    %v866 = vmul.f32 %v843, %v862
    %v867 = vmul.f32 %v845, %v863
    %v868 = vmul.f32 %v847, %v864
    %v869 = vmul.f32 %v849, %v865
    %v870 = vlaneseq
    %v871 = vshrl.u32 %v870, 7
    %v872 = vsub.s32 2, %v871
    %v873 = vrot.slane %v26, %v872
    %v874 = vmul.f32 %v873, %v82
    %v875 = vmul.f32 %v873, %v87
    %v876 = vmul.f32 %v873, %v92
    %v877 = vmul.f32 %v873, %v97
    %v878 = vmul.f32 %v873, %v102
    %v879 = vmul.f32 %v873, %v107
    %v880 = vmul.f32 %v873, %v112
    %v881 = vmul.f32 %v873, %v117
    %v882 = vmul.f32 %v873, %v122
    %v883 = vmul.f32 %v873, %v127
    %v884 = vmul.f32 %v873, %v132
    %v885 = vmul.f32 %v873, %v137
    %v886 = vmul.f32 %v873, %v142
    %v887 = vmul.f32 %v873, %v147
    %v888 = vmul.f32 %v873, %v152
    %v889 = vmul.f32 %v873, %v157
    %v890 = vadd.f32 %v874, %v178
    %v891 = vadd.f32 %v875, %v183
    %v892 = vadd.f32 %v876, %v188
    %v893 = vadd.f32 %v877, %v193
    %v894 = vadd.f32 %v878, %v198
    %v895 = vadd.f32 %v879, %v203
    %v896 = vadd.f32 %v880, %v208
    %v897 = vadd.f32 %v881, %v213
    %v898 = vadd.f32 %v882, %v218
    %v899 = vadd.f32 %v883, %v223
    %v900 = vadd.f32 %v884, %v228
    %v901 = vadd.f32 %v885, %v233
    %v902 = vadd.f32 %v886, %v238
    %v903 = vadd.f32 %v887, %v243
    %v904 = vadd.f32 %v888, %v248
    %v905 = vadd.f32 %v889, %v253
    %906 = vmatprep.subr.mxu0 0.0
    %907 = vmatpush1.msra.mxu0 %v866
    %908 = vmatprep.subr.mxu0 0.0
    %909 = vmatpush1.msra.mxu0 %v867
    %910 = vmatprep.subr.mxu0 0.0
    %911 = vmatpush1.msra.mxu0 %v868
    %912 = vmatprep.subr.mxu0 0.0
    %913 = vmatpush1.msra.mxu0 %v869
    %914 = vmatprep.subr.mxu0 0.0
    %915 = vmatpush1.msra.mxu0 0.0
    %916 = vmatprep.subr.mxu0 0.0
    %917 = vmatpush1.msra.mxu0 0.0
    %918 = vmatprep.subr.mxu0 0.0
    %919 = vmatpush1.msra.mxu0 0.0
    %920 = vmatprep.subr.mxu0 0.0
    %921 = vmatpush1.msra.mxu0 0.0
    %922 = vmatprep.subr.mxu0 0.0
    %923 = vmatpush1.msra.mxu0 0.0
    %924 = vmatprep.subr.mxu0 0.0
    %925 = vmatpush1.msra.mxu0 0.0
    %926 = vmatprep.subr.mxu0 0.0
    %927 = vmatpush1.msra.mxu0 0.0
    %928 = vmatprep.subr.mxu0 0.0
    %929 = vmatpush1.msra.mxu0 0.0
    %930 = vmatprep.subr.mxu0 0.0
    %931 = vmatpush1.msra.mxu0 0.0
    %932 = vmatprep.subr.mxu0 0.0
    %933 = vmatpush1.msra.mxu0 0.0
    %934 = vmatprep.subr.mxu0 0.0
    %935 = vmatpush1.msra.mxu0 0.0
    %936 = vmatprep.subr.mxu0 0.0
    %937 = vmatpush1.msra.mxu0 0.0
    %938 = vmatprep.subr.mxu0 0.0
    %939 = vmatpush1.msra.mxu0 0.0
    %940 = vmatprep.subr.mxu0 0.0
    %941 = vmatpush1.msra.mxu0 0.0
    %942 = vmatprep.subr.mxu0 0.0
    %943 = vmatpush1.msra.mxu0 0.0
    %944 = vmatprep.subr.mxu0 0.0
    %945 = vmatpush1.msra.mxu0 0.0
    %946 = vmatprep.subr.mxu0 0.0
    %947 = vmatpush1.msra.mxu0 0.0
    %948 = vmatprep.subr.mxu0 0.0
    %949 = vmatpush1.msra.mxu0 0.0
    %950 = vmatprep.subr.mxu0 0.0
    %951 = vmatpush1.msra.mxu0 0.0
    %952 = vmatprep.subr.mxu0 0.0
    %953 = vmatpush1.msra.mxu0 0.0
    %954 = vmatprep.subr.mxu0 0.0
    %955 = vmatpush1.msra.mxu0 0.0
    %956 = vmatprep.subr.mxu0 0.0
    %957 = vmatpush1.msra.mxu0 0.0
    %958 = vmatprep.subr.mxu0 0.0
    %959 = vmatpush1.msra.mxu0 0.0
    %960 = vmatprep.subr.mxu0 0.0
    %961 = vmatpush1.msra.mxu0 0.0
    %962 = vmatprep.subr.mxu0 0.0
    %963 = vmatpush1.msra.mxu0 0.0
    %964 = vmatprep.subr.mxu0 0.0
    %965 = vmatpush1.msra.mxu0 0.0
    %966 = vmatprep.subr.mxu0 0.0
    %967 = vmatpush1.msra.mxu0 0.0
    %968 = vmatprep.subr.mxu0 0.0
    %969 = vmatpush1.msra.mxu0 0.0
    %970 = vmatprep.mubr.f32.mxu0 0.0
    %971 = vmatmul.mubr.f32.gmra.mrb[0].mxu0 %v273
    %v972 = vpop.f32.mrb[0].mxu0
    %v973 = vadd.f32 0.0, %v972
    %v974 = vpop.f32.mrb[0].mxu0
    %975 = vmatprep.mubr.f32.mxu0 0.0
    %976 = vmatmul.mubr.f32.gmra.mrb[0].mxu0 %v276
    %v977 = vpop.f32.mrb[0].mxu0
    %v978 = vadd.f32 0.0, %v977
    %v979 = vpop.f32.mrb[0].mxu0
    %980 = vmatprep.mubr.f32.mxu0 0.0
    %981 = vmatmul.mubr.f32.gmra.mrb[0].mxu0 %v279
    %v982 = vpop.f32.mrb[0].mxu0
    %v983 = vadd.f32 0.0, %v982
    %v984 = vpop.f32.mrb[0].mxu0
    %985 = vmatprep.mubr.f32.mxu0 0.0
    %986 = vmatmul.mubr.f32.gmra.mrb[0].mxu0 %v282
    %v987 = vpop.f32.mrb[0].mxu0
    %v988 = vadd.f32 0.0, %v987
    %v989 = vpop.f32.mrb[0].mxu0
    %990 = vmatprep.mubr.f32.mxu0 0.0
    %991 = vmatmul.mubr.f32.gmra.mrb[0].mxu0 %v285
    %v992 = vpop.f32.mrb[0].mxu0
    %v993 = vadd.f32 0.0, %v992
    %v994 = vpop.f32.mrb[0].mxu0
    %995 = vmatprep.mubr.f32.mxu0 0.0
    %996 = vmatmul.mubr.f32.gmra.mrb[0].mxu0 %v288
    %v997 = vpop.f32.mrb[0].mxu0
    %v998 = vadd.f32 0.0, %v997
    %v999 = vpop.f32.mrb[0].mxu0
    %1000 = vmatprep.mubr.f32.mxu0 0.0
    %1001 = vmatmul.mubr.f32.gmra.mrb[0].mxu0 %v291
    %v1002 = vpop.f32.mrb[0].mxu0
    %v1003 = vadd.f32 0.0, %v1002
    %v1004 = vpop.f32.mrb[0].mxu0
    %1005 = vmatprep.mubr.f32.mxu0 0.0
    %1006 = vmatmul.mubr.f32.gmra.mrb[0].mxu0 %v294
    %v1007 = vpop.f32.mrb[0].mxu0
    %v1008 = vadd.f32 0.0, %v1007
    %v1009 = vpop.f32.mrb[0].mxu0
    %1010 = vmatprep.mubr.f32.mxu0 0.0
    %1011 = vmatmul.mubr.f32.gmra.mrb[0].mxu0 %v297
    %v1012 = vpop.f32.mrb[0].mxu0
    %v1013 = vadd.f32 0.0, %v1012
    %v1014 = vpop.f32.mrb[0].mxu0
    %1015 = vmatprep.mubr.f32.mxu0 0.0
    %1016 = vmatmul.mubr.f32.gmra.mrb[0].mxu0 %v300
    %v1017 = vpop.f32.mrb[0].mxu0
    %v1018 = vadd.f32 0.0, %v1017
    %v1019 = vpop.f32.mrb[0].mxu0
    %1020 = vmatprep.mubr.f32.mxu0 0.0
    %1021 = vmatmul.mubr.f32.gmra.mrb[0].mxu0 %v303
    %v1022 = vpop.f32.mrb[0].mxu0
    %v1023 = vadd.f32 0.0, %v1022
    %v1024 = vpop.f32.mrb[0].mxu0
    %1025 = vmatprep.mubr.f32.mxu0 0.0
    %1026 = vmatmul.mubr.f32.gmra.mrb[0].mxu0 %v306
    %v1027 = vpop.f32.mrb[0].mxu0
    %v1028 = vadd.f32 0.0, %v1027
    %v1029 = vpop.f32.mrb[0].mxu0
    %1030 = vmatprep.mubr.f32.mxu0 0.0
    %1031 = vmatmul.mubr.f32.gmra.mrb[0].mxu0 %v309
    %v1032 = vpop.f32.mrb[0].mxu0
    %v1033 = vadd.f32 0.0, %v1032
    %v1034 = vpop.f32.mrb[0].mxu0
    %1035 = vmatprep.mubr.f32.mxu0 0.0
    %1036 = vmatmul.mubr.f32.gmra.mrb[0].mxu0 %v312
    %v1037 = vpop.f32.mrb[0].mxu0
    %v1038 = vadd.f32 0.0, %v1037
    %v1039 = vpop.f32.mrb[0].mxu0
    %1040 = vmatprep.mubr.f32.mxu0 0.0
    %1041 = vmatmul.mubr.f32.gmra.mrb[0].mxu0 %v315
    %v1042 = vpop.f32.mrb[0].mxu0
    %v1043 = vadd.f32 0.0, %v1042
    %v1044 = vpop.f32.mrb[0].mxu0
    %1045 = vmatprep.mubr.f32.mxu0 0.0
    %1046 = vmatmul.mubr.f32.gmra.mrb[0].mxu0 %v318
    %v1047 = vpop.f32.mrb[0].mxu0
    %v1048 = vadd.f32 0.0, %v1047
    %v1049 = vpop.f32.mrb[0].mxu0
    %1050 = vdwg.mxu0
    %v1051 = vadd.f32 %v890, %v973
    %v1052 = vadd.f32 %v891, %v978
    %v1053 = vadd.f32 %v892, %v983
    %v1054 = vadd.f32 %v893, %v988
    %v1055 = vadd.f32 %v894, %v993
    %v1056 = vadd.f32 %v895, %v998
    %v1057 = vadd.f32 %v896, %v1003
    %v1058 = vadd.f32 %v897, %v1008
    %v1059 = vadd.f32 %v898, %v1013
    %v1060 = vadd.f32 %v899, %v1018
    %v1061 = vadd.f32 %v900, %v1023
    %v1062 = vadd.f32 %v901, %v1028
    %v1063 = vadd.f32 %v902, %v1033
    %v1064 = vadd.f32 %v903, %v1038
    %v1065 = vadd.f32 %v904, %v1043
    %v1066 = vadd.f32 %v905, %v1048
    %v1067 = vxor.u32 %v1051, 2147483648
    %v1068 = vxor.u32 %v1052, 2147483648
    %v1069 = vxor.u32 %v1053, 2147483648
    %v1070 = vxor.u32 %v1054, 2147483648
    %v1071 = vxor.u32 %v1055, 2147483648
    %v1072 = vxor.u32 %v1056, 2147483648
    %v1073 = vxor.u32 %v1057, 2147483648
    %v1074 = vxor.u32 %v1058, 2147483648
    %v1075 = vmul.f32 %v1067, 1.442695
    %v1076 = vpow.pop %v1075
    %v1077 = vmul.f32 %v1068, 1.442695
    %v1078 = vpow.pop %v1077
    %v1079 = vmul.f32 %v1069, 1.442695
    %v1080 = vpow.pop %v1079
    %v1081 = vmul.f32 %v1070, 1.442695
    %v1082 = vpow.pop %v1081
    %v1083 = vmul.f32 %v1071, 1.442695
    %v1084 = vpow.pop %v1083
    %v1085 = vmul.f32 %v1072, 1.442695
    %v1086 = vpow.pop %v1085
    %v1087 = vmul.f32 %v1073, 1.442695
    %v1088 = vpow.pop %v1087
    %v1089 = vmul.f32 %v1074, 1.442695
    %v1090 = vpow.pop %v1089
    %v1091 = vadd.f32 %v1076, 1.0
    %v1092 = vadd.f32 %v1078, 1.0
    %v1093 = vadd.f32 %v1080, 1.0
    %v1094 = vadd.f32 %v1082, 1.0
    %v1095 = vadd.f32 %v1084, 1.0
    %v1096 = vadd.f32 %v1086, 1.0
    %v1097 = vadd.f32 %v1088, 1.0
    %v1098 = vadd.f32 %v1090, 1.0
    %v1099 = vrcp.pop %v1091
    %v1100 = vmul.f32 1.0, %v1099
    %v1101 = vrcp.pop %v1092
    %v1102 = vmul.f32 1.0, %v1101
    %v1103 = vrcp.pop %v1093
    %v1104 = vmul.f32 1.0, %v1103
    %v1105 = vrcp.pop %v1094
    %v1106 = vmul.f32 1.0, %v1105
    %v1107 = vrcp.pop %v1095
    %v1108 = vmul.f32 1.0, %v1107
    %v1109 = vrcp.pop %v1096
    %v1110 = vmul.f32 1.0, %v1109
    %v1111 = vrcp.pop %v1097
    %v1112 = vmul.f32 1.0, %v1111
    %v1113 = vrcp.pop %v1098
    %v1114 = vmul.f32 1.0, %v1113
    %v1115 = vtanh.pop %v1059
    %v1116 = vtanh.pop %v1060
    %v1117 = vtanh.pop %v1061
    %v1118 = vtanh.pop %v1062
    %v1119 = vxor.u32 %v1063, 2147483648
    %v1120 = vxor.u32 %v1064, 2147483648
    %v1121 = vxor.u32 %v1065, 2147483648
    %v1122 = vxor.u32 %v1066, 2147483648
    %v1123 = vmul.f32 %v1119, 1.442695
    %v1124 = vpow.pop %v1123
    %v1125 = vmul.f32 %v1120, 1.442695
    %v1126 = vpow.pop %v1125
    %v1127 = vmul.f32 %v1121, 1.442695
    %v1128 = vpow.pop %v1127
    %v1129 = vmul.f32 %v1122, 1.442695
    %v1130 = vpow.pop %v1129
    %v1131 = vadd.f32 %v1124, 1.0
    %v1132 = vadd.f32 %v1126, 1.0
    %v1133 = vadd.f32 %v1128, 1.0
    %v1134 = vadd.f32 %v1130, 1.0
    %v1135 = vrcp.pop %v1131
    %v1136 = vmul.f32 1.0, %v1135
    %v1137 = vrcp.pop %v1132
    %v1138 = vmul.f32 1.0, %v1137
    %v1139 = vrcp.pop %v1133
    %v1140 = vmul.f32 1.0, %v1139
    %v1141 = vrcp.pop %v1134
    %v1142 = vmul.f32 1.0, %v1141
    %v1143 = vmul.f32 %v1108, %v858
    %v1144 = vmul.f32 %v1110, %v859
    %v1145 = vmul.f32 %v1112, %v860
    %v1146 = vmul.f32 %v1114, %v861
    %v1147 = vmul.f32 %v1100, %v1115
    %v1148 = vmul.f32 %v1102, %v1116
    %v1149 = vmul.f32 %v1104, %v1117
    %v1150 = vmul.f32 %v1106, %v1118
    %v1151 = vadd.f32 %v1143, %v1147
    %v1152 = vadd.f32 %v1144, %v1148
    %v1153 = vadd.f32 %v1145, %v1149
    %v1154 = vadd.f32 %v1146, %v1150
    %v1155 = vtanh.pop %v1151
    %v1156 = vtanh.pop %v1152
    %v1157 = vtanh.pop %v1153
    %v1158 = vtanh.pop %v1154
    %v1159 = vmul.f32 %v1136, %v1155
    %v1160 = vmul.f32 %v1138, %v1156
    %v1161 = vmul.f32 %v1140, %v1157
    %v1162 = vmul.f32 %v1142, %v1158
    %v1163 = vlaneseq
    %v1164 = vshrl.u32 %v1163, 7
    %v1165 = vsub.s32 3, %v1164
    %v1166 = vrot.slane %v26, %v1165
    %v1167 = vmul.f32 %v1166, %v82
    %v1168 = vmul.f32 %v1166, %v87
    %v1169 = vmul.f32 %v1166, %v92
    %v1170 = vmul.f32 %v1166, %v97
    %v1171 = vmul.f32 %v1166, %v102
    %v1172 = vmul.f32 %v1166, %v107
    %v1173 = vmul.f32 %v1166, %v112
    %v1174 = vmul.f32 %v1166, %v117
    %v1175 = vmul.f32 %v1166, %v122
    %v1176 = vmul.f32 %v1166, %v127
    %v1177 = vmul.f32 %v1166, %v132
    %v1178 = vmul.f32 %v1166, %v137
    %v1179 = vmul.f32 %v1166, %v142
    %v1180 = vmul.f32 %v1166, %v147
    %v1181 = vmul.f32 %v1166, %v152
    %v1182 = vmul.f32 %v1166, %v157
    %v1183 = vadd.f32 %v1167, %v178
    %v1184 = vadd.f32 %v1168, %v183
    %v1185 = vadd.f32 %v1169, %v188
    %v1186 = vadd.f32 %v1170, %v193
    %v1187 = vadd.f32 %v1171, %v198
    %v1188 = vadd.f32 %v1172, %v203
    %v1189 = vadd.f32 %v1173, %v208
    %v1190 = vadd.f32 %v1174, %v213
    %v1191 = vadd.f32 %v1175, %v218
    %v1192 = vadd.f32 %v1176, %v223
    %v1193 = vadd.f32 %v1177, %v228
    %v1194 = vadd.f32 %v1178, %v233
    %v1195 = vadd.f32 %v1179, %v238
    %v1196 = vadd.f32 %v1180, %v243
    %v1197 = vadd.f32 %v1181, %v248
    %v1198 = vadd.f32 %v1182, %v253
    %1199 = vmatprep.subr.mxu0 0.0
    %1200 = vmatpush1.msra.mxu0 %v1159
    %1201 = vmatprep.subr.mxu0 0.0
    %1202 = vmatpush1.msra.mxu0 %v1160
    %1203 = vmatprep.subr.mxu0 0.0
    %1204 = vmatpush1.msra.mxu0 %v1161
    %1205 = vmatprep.subr.mxu0 0.0
    %1206 = vmatpush1.msra.mxu0 %v1162
    %1207 = vmatprep.subr.mxu0 0.0
    %1208 = vmatpush1.msra.mxu0 0.0
    %1209 = vmatprep.subr.mxu0 0.0
    %1210 = vmatpush1.msra.mxu0 0.0
    %1211 = vmatprep.subr.mxu0 0.0
    %1212 = vmatpush1.msra.mxu0 0.0
    %1213 = vmatprep.subr.mxu0 0.0
    %1214 = vmatpush1.msra.mxu0 0.0
    %1215 = vmatprep.subr.mxu0 0.0
    %1216 = vmatpush1.msra.mxu0 0.0
    %1217 = vmatprep.subr.mxu0 0.0
    %1218 = vmatpush1.msra.mxu0 0.0
    %1219 = vmatprep.subr.mxu0 0.0
    %1220 = vmatpush1.msra.mxu0 0.0
    %1221 = vmatprep.subr.mxu0 0.0
    %1222 = vmatpush1.msra.mxu0 0.0
    %1223 = vmatprep.subr.mxu0 0.0
    %1224 = vmatpush1.msra.mxu0 0.0
    %1225 = vmatprep.subr.mxu0 0.0
    %1226 = vmatpush1.msra.mxu0 0.0
    %1227 = vmatprep.subr.mxu0 0.0
    %1228 = vmatpush1.msra.mxu0 0.0
    %1229 = vmatprep.subr.mxu0 0.0
    %1230 = vmatpush1.msra.mxu0 0.0
    %1231 = vmatprep.subr.mxu0 0.0
    %1232 = vmatpush1.msra.mxu0 0.0
    %1233 = vmatprep.subr.mxu0 0.0
    %1234 = vmatpush1.msra.mxu0 0.0
    %1235 = vmatprep.subr.mxu0 0.0
    %1236 = vmatpush1.msra.mxu0 0.0
    %1237 = vmatprep.subr.mxu0 0.0
    %1238 = vmatpush1.msra.mxu0 0.0
    %1239 = vmatprep.subr.mxu0 0.0
    %1240 = vmatpush1.msra.mxu0 0.0
    %1241 = vmatprep.subr.mxu0 0.0
    %1242 = vmatpush1.msra.mxu0 0.0
    %1243 = vmatprep.subr.mxu0 0.0
    %1244 = vmatpush1.msra.mxu0 0.0
    %1245 = vmatprep.subr.mxu0 0.0
    %1246 = vmatpush1.msra.mxu0 0.0
    %1247 = vmatprep.subr.mxu0 0.0
    %1248 = vmatpush1.msra.mxu0 0.0
    %1249 = vmatprep.subr.mxu0 0.0
    %1250 = vmatpush1.msra.mxu0 0.0
    %1251 = vmatprep.subr.mxu0 0.0
    %1252 = vmatpush1.msra.mxu0 0.0
    %1253 = vmatprep.subr.mxu0 0.0
    %1254 = vmatpush1.msra.mxu0 0.0
    %1255 = vmatprep.subr.mxu0 0.0
    %1256 = vmatpush1.msra.mxu0 0.0
    %1257 = vmatprep.subr.mxu0 0.0
    %1258 = vmatpush1.msra.mxu0 0.0
    %1259 = vmatprep.subr.mxu0 0.0
    %1260 = vmatpush1.msra.mxu0 0.0
    %1261 = vmatprep.subr.mxu0 0.0
    %1262 = vmatpush1.msra.mxu0 0.0
    %1263 = vmatprep.mubr.f32.mxu0 0.0
    %1264 = vmatmul.mubr.f32.gmra.mrb[0].mxu0 %v273
    %v1265 = vpop.f32.mrb[0].mxu0
    %v1266 = vadd.f32 0.0, %v1265
    %v1267 = vpop.f32.mrb[0].mxu0
    %1268 = vmatprep.mubr.f32.mxu0 0.0
    %1269 = vmatmul.mubr.f32.gmra.mrb[0].mxu0 %v276
    %v1270 = vpop.f32.mrb[0].mxu0
    %v1271 = vadd.f32 0.0, %v1270
    %v1272 = vpop.f32.mrb[0].mxu0
    %1273 = vmatprep.mubr.f32.mxu0 0.0
    %1274 = vmatmul.mubr.f32.gmra.mrb[0].mxu0 %v279
    %v1275 = vpop.f32.mrb[0].mxu0
    %v1276 = vadd.f32 0.0, %v1275
    %v1277 = vpop.f32.mrb[0].mxu0
    %1278 = vmatprep.mubr.f32.mxu0 0.0
    %1279 = vmatmul.mubr.f32.gmra.mrb[0].mxu0 %v282
    %v1280 = vpop.f32.mrb[0].mxu0
    %v1281 = vadd.f32 0.0, %v1280
    %v1282 = vpop.f32.mrb[0].mxu0
    %1283 = vmatprep.mubr.f32.mxu0 0.0
    %1284 = vmatmul.mubr.f32.gmra.mrb[0].mxu0 %v285
    %v1285 = vpop.f32.mrb[0].mxu0
    %v1286 = vadd.f32 0.0, %v1285
    %v1287 = vpop.f32.mrb[0].mxu0
    %1288 = vmatprep.mubr.f32.mxu0 0.0
    %1289 = vmatmul.mubr.f32.gmra.mrb[0].mxu0 %v288
    %v1290 = vpop.f32.mrb[0].mxu0
    %v1291 = vadd.f32 0.0, %v1290
    %v1292 = vpop.f32.mrb[0].mxu0
    %1293 = vmatprep.mubr.f32.mxu0 0.0
    %1294 = vmatmul.mubr.f32.gmra.mrb[0].mxu0 %v291
    %v1295 = vpop.f32.mrb[0].mxu0
    %v1296 = vadd.f32 0.0, %v1295
    %v1297 = vpop.f32.mrb[0].mxu0
    %1298 = vmatprep.mubr.f32.mxu0 0.0
    %1299 = vmatmul.mubr.f32.gmra.mrb[0].mxu0 %v294
    %v1300 = vpop.f32.mrb[0].mxu0
    %v1301 = vadd.f32 0.0, %v1300
    %v1302 = vpop.f32.mrb[0].mxu0
    %1303 = vmatprep.mubr.f32.mxu0 0.0
    %1304 = vmatmul.mubr.f32.gmra.mrb[0].mxu0 %v297
    %v1305 = vpop.f32.mrb[0].mxu0
    %v1306 = vadd.f32 0.0, %v1305
    %v1307 = vpop.f32.mrb[0].mxu0
    %1308 = vmatprep.mubr.f32.mxu0 0.0
    %1309 = vmatmul.mubr.f32.gmra.mrb[0].mxu0 %v300
    %v1310 = vpop.f32.mrb[0].mxu0
    %v1311 = vadd.f32 0.0, %v1310
    %v1312 = vpop.f32.mrb[0].mxu0
    %1313 = vmatprep.mubr.f32.mxu0 0.0
    %1314 = vmatmul.mubr.f32.gmra.mrb[0].mxu0 %v303
    %v1315 = vpop.f32.mrb[0].mxu0
    %v1316 = vadd.f32 0.0, %v1315
    %v1317 = vpop.f32.mrb[0].mxu0
    %1318 = vmatprep.mubr.f32.mxu0 0.0
    %1319 = vmatmul.mubr.f32.gmra.mrb[0].mxu0 %v306
    %v1320 = vpop.f32.mrb[0].mxu0
    %v1321 = vadd.f32 0.0, %v1320
    %v1322 = vpop.f32.mrb[0].mxu0
    %1323 = vmatprep.mubr.f32.mxu0 0.0
    %1324 = vmatmul.mubr.f32.gmra.mrb[0].mxu0 %v309
    %v1325 = vpop.f32.mrb[0].mxu0
    %v1326 = vadd.f32 0.0, %v1325
    %v1327 = vpop.f32.mrb[0].mxu0
    %1328 = vmatprep.mubr.f32.mxu0 0.0
    %1329 = vmatmul.mubr.f32.gmra.mrb[0].mxu0 %v312
    %v1330 = vpop.f32.mrb[0].mxu0
    %v1331 = vadd.f32 0.0, %v1330
    %v1332 = vpop.f32.mrb[0].mxu0
    %1333 = vmatprep.mubr.f32.mxu0 0.0
    %1334 = vmatmul.mubr.f32.gmra.mrb[0].mxu0 %v315
    %v1335 = vpop.f32.mrb[0].mxu0
    %v1336 = vadd.f32 0.0, %v1335
    %v1337 = vpop.f32.mrb[0].mxu0
    %1338 = vmatprep.mubr.f32.mxu0 0.0
    %1339 = vmatmul.mubr.f32.gmra.mrb[0].mxu0 %v318
    %v1340 = vpop.f32.mrb[0].mxu0
    %v1341 = vadd.f32 0.0, %v1340
    %v1342 = vpop.f32.mrb[0].mxu0
    %1343 = vdwg.mxu0
    %v1344 = vadd.f32 %v1183, %v1266
    %v1345 = vadd.f32 %v1184, %v1271
    %v1346 = vadd.f32 %v1185, %v1276
    %v1347 = vadd.f32 %v1186, %v1281
    %v1348 = vadd.f32 %v1187, %v1286
    %v1349 = vadd.f32 %v1188, %v1291
    %v1350 = vadd.f32 %v1189, %v1296
    %v1351 = vadd.f32 %v1190, %v1301
    %v1352 = vadd.f32 %v1191, %v1306
    %v1353 = vadd.f32 %v1192, %v1311
    %v1354 = vadd.f32 %v1193, %v1316
    %v1355 = vadd.f32 %v1194, %v1321
    %v1356 = vadd.f32 %v1195, %v1326
    %v1357 = vadd.f32 %v1196, %v1331
    %v1358 = vadd.f32 %v1197, %v1336
    %v1359 = vadd.f32 %v1198, %v1341
    %v1360 = vxor.u32 %v1344, 2147483648
    %v1361 = vxor.u32 %v1345, 2147483648
    %v1362 = vxor.u32 %v1346, 2147483648
    %v1363 = vxor.u32 %v1347, 2147483648
    %v1364 = vxor.u32 %v1348, 2147483648
    %v1365 = vxor.u32 %v1349, 2147483648
    %v1366 = vxor.u32 %v1350, 2147483648
    %v1367 = vxor.u32 %v1351, 2147483648
    %v1368 = vmul.f32 %v1360, 1.442695
    %v1369 = vpow.pop %v1368
    %v1370 = vmul.f32 %v1361, 1.442695
    %v1371 = vpow.pop %v1370
    %v1372 = vmul.f32 %v1362, 1.442695
    %v1373 = vpow.pop %v1372
    %v1374 = vmul.f32 %v1363, 1.442695
    %v1375 = vpow.pop %v1374
    %v1376 = vmul.f32 %v1364, 1.442695
    %v1377 = vpow.pop %v1376
    %v1378 = vmul.f32 %v1365, 1.442695
    %v1379 = vpow.pop %v1378
    %v1380 = vmul.f32 %v1366, 1.442695
    %v1381 = vpow.pop %v1380
    %v1382 = vmul.f32 %v1367, 1.442695
    %v1383 = vpow.pop %v1382
    %v1384 = vadd.f32 %v1369, 1.0
    %v1385 = vadd.f32 %v1371, 1.0
    %v1386 = vadd.f32 %v1373, 1.0
    %v1387 = vadd.f32 %v1375, 1.0
    %v1388 = vadd.f32 %v1377, 1.0
    %v1389 = vadd.f32 %v1379, 1.0
    %v1390 = vadd.f32 %v1381, 1.0
    %v1391 = vadd.f32 %v1383, 1.0
    %v1392 = vrcp.pop %v1384
    %v1393 = vmul.f32 1.0, %v1392
    %v1394 = vrcp.pop %v1385
    %v1395 = vmul.f32 1.0, %v1394
    %v1396 = vrcp.pop %v1386
    %v1397 = vmul.f32 1.0, %v1396
    %v1398 = vrcp.pop %v1387
    %v1399 = vmul.f32 1.0, %v1398
    %v1400 = vrcp.pop %v1388
    %v1401 = vmul.f32 1.0, %v1400
    %v1402 = vrcp.pop %v1389
    %v1403 = vmul.f32 1.0, %v1402
    %v1404 = vrcp.pop %v1390
    %v1405 = vmul.f32 1.0, %v1404
    %v1406 = vrcp.pop %v1391
    %v1407 = vmul.f32 1.0, %v1406
    %v1408 = vtanh.pop %v1352
    %v1409 = vtanh.pop %v1353
    %v1410 = vtanh.pop %v1354
    %v1411 = vtanh.pop %v1355
    %v1412 = vxor.u32 %v1356, 2147483648
    %v1413 = vxor.u32 %v1357, 2147483648
    %v1414 = vxor.u32 %v1358, 2147483648
    %v1415 = vxor.u32 %v1359, 2147483648
    %v1416 = vmul.f32 %v1412, 1.442695
    %v1417 = vpow.pop %v1416
    %v1418 = vmul.f32 %v1413, 1.442695
    %v1419 = vpow.pop %v1418
    %v1420 = vmul.f32 %v1414, 1.442695
    %v1421 = vpow.pop %v1420
    %v1422 = vmul.f32 %v1415, 1.442695
    %v1423 = vpow.pop %v1422
    %v1424 = vadd.f32 %v1417, 1.0
    %v1425 = vadd.f32 %v1419, 1.0
    %v1426 = vadd.f32 %v1421, 1.0
    %v1427 = vadd.f32 %v1423, 1.0
    %v1428 = vrcp.pop %v1424
    %v1429 = vmul.f32 1.0, %v1428
    %v1430 = vrcp.pop %v1425
    %v1431 = vmul.f32 1.0, %v1430
    %v1432 = vrcp.pop %v1426
    %v1433 = vmul.f32 1.0, %v1432
    %v1434 = vrcp.pop %v1427
    %v1435 = vmul.f32 1.0, %v1434
    %v1436 = vmul.f32 %v1401, %v1151
    %v1437 = vmul.f32 %v1403, %v1152
    %v1438 = vmul.f32 %v1405, %v1153
    %v1439 = vmul.f32 %v1407, %v1154
    %v1440 = vmul.f32 %v1393, %v1408
    %v1441 = vmul.f32 %v1395, %v1409
    %v1442 = vmul.f32 %v1397, %v1410
    %v1443 = vmul.f32 %v1399, %v1411
    %v1444 = vadd.f32 %v1436, %v1440
    %v1445 = vadd.f32 %v1437, %v1441
    %v1446 = vadd.f32 %v1438, %v1442
    %v1447 = vadd.f32 %v1439, %v1443
    %v1448 = vtanh.pop %v1444
    %v1449 = vtanh.pop %v1445
    %v1450 = vtanh.pop %v1446
    %v1451 = vtanh.pop %v1447
    %v1452 = vmul.f32 %v1429, %v1448
    %v1453 = vmul.f32 %v1431, %v1449
    %v1454 = vmul.f32 %v1433, %v1450
    %v1455 = vmul.f32 %v1435, %v1451
    %v1456 = vlaneseq
    %v1457 = vshrl.u32 %v1456, 7
    %v1458 = vsub.s32 4, %v1457
    %v1459 = vrot.slane %v26, %v1458
    %v1460 = vmul.f32 %v1459, %v82
    %v1461 = vmul.f32 %v1459, %v87
    %v1462 = vmul.f32 %v1459, %v92
    %v1463 = vmul.f32 %v1459, %v97
    %v1464 = vmul.f32 %v1459, %v102
    %v1465 = vmul.f32 %v1459, %v107
    %v1466 = vmul.f32 %v1459, %v112
    %v1467 = vmul.f32 %v1459, %v117
    %v1468 = vmul.f32 %v1459, %v122
    %v1469 = vmul.f32 %v1459, %v127
    %v1470 = vmul.f32 %v1459, %v132
    %v1471 = vmul.f32 %v1459, %v137
    %v1472 = vmul.f32 %v1459, %v142
    %v1473 = vmul.f32 %v1459, %v147
    %v1474 = vmul.f32 %v1459, %v152
    %v1475 = vmul.f32 %v1459, %v157
    %v1476 = vadd.f32 %v1460, %v178
    %v1477 = vadd.f32 %v1461, %v183
    %v1478 = vadd.f32 %v1462, %v188
    %v1479 = vadd.f32 %v1463, %v193
    %v1480 = vadd.f32 %v1464, %v198
    %v1481 = vadd.f32 %v1465, %v203
    %v1482 = vadd.f32 %v1466, %v208
    %v1483 = vadd.f32 %v1467, %v213
    %v1484 = vadd.f32 %v1468, %v218
    %v1485 = vadd.f32 %v1469, %v223
    %v1486 = vadd.f32 %v1470, %v228
    %v1487 = vadd.f32 %v1471, %v233
    %v1488 = vadd.f32 %v1472, %v238
    %v1489 = vadd.f32 %v1473, %v243
    %v1490 = vadd.f32 %v1474, %v248
    %v1491 = vadd.f32 %v1475, %v253
    %1492 = vmatprep.subr.mxu0 0.0
    %1493 = vmatpush1.msra.mxu0 %v1452
    %1494 = vmatprep.subr.mxu0 0.0
    %1495 = vmatpush1.msra.mxu0 %v1453
    %1496 = vmatprep.subr.mxu0 0.0
    %1497 = vmatpush1.msra.mxu0 %v1454
    %1498 = vmatprep.subr.mxu0 0.0
    %1499 = vmatpush1.msra.mxu0 %v1455
    %1500 = vmatprep.subr.mxu0 0.0
    %1501 = vmatpush1.msra.mxu0 0.0
    %1502 = vmatprep.subr.mxu0 0.0
    %1503 = vmatpush1.msra.mxu0 0.0
    %1504 = vmatprep.subr.mxu0 0.0
    %1505 = vmatpush1.msra.mxu0 0.0
    %1506 = vmatprep.subr.mxu0 0.0
    %1507 = vmatpush1.msra.mxu0 0.0
    %1508 = vmatprep.subr.mxu0 0.0
    %1509 = vmatpush1.msra.mxu0 0.0
    %1510 = vmatprep.subr.mxu0 0.0
    %1511 = vmatpush1.msra.mxu0 0.0
    %1512 = vmatprep.subr.mxu0 0.0
    %1513 = vmatpush1.msra.mxu0 0.0
    %1514 = vmatprep.subr.mxu0 0.0
    %1515 = vmatpush1.msra.mxu0 0.0
    %1516 = vmatprep.subr.mxu0 0.0
    %1517 = vmatpush1.msra.mxu0 0.0
    %1518 = vmatprep.subr.mxu0 0.0
    %1519 = vmatpush1.msra.mxu0 0.0
    %1520 = vmatprep.subr.mxu0 0.0
    %1521 = vmatpush1.msra.mxu0 0.0
    %1522 = vmatprep.subr.mxu0 0.0
    %1523 = vmatpush1.msra.mxu0 0.0
    %1524 = vmatprep.subr.mxu0 0.0
    %1525 = vmatpush1.msra.mxu0 0.0
    %1526 = vmatprep.subr.mxu0 0.0
    %1527 = vmatpush1.msra.mxu0 0.0
    %1528 = vmatprep.subr.mxu0 0.0
    %1529 = vmatpush1.msra.mxu0 0.0
    %1530 = vmatprep.subr.mxu0 0.0
    %1531 = vmatpush1.msra.mxu0 0.0
    %1532 = vmatprep.subr.mxu0 0.0
    %1533 = vmatpush1.msra.mxu0 0.0
    %1534 = vmatprep.subr.mxu0 0.0
    %1535 = vmatpush1.msra.mxu0 0.0
    %1536 = vmatprep.subr.mxu0 0.0
    %1537 = vmatpush1.msra.mxu0 0.0
    %1538 = vmatprep.subr.mxu0 0.0
    %1539 = vmatpush1.msra.mxu0 0.0
    %1540 = vmatprep.subr.mxu0 0.0
    %1541 = vmatpush1.msra.mxu0 0.0
    %1542 = vmatprep.subr.mxu0 0.0
    %1543 = vmatpush1.msra.mxu0 0.0
    %1544 = vmatprep.subr.mxu0 0.0
    %1545 = vmatpush1.msra.mxu0 0.0
    %1546 = vmatprep.subr.mxu0 0.0
    %1547 = vmatpush1.msra.mxu0 0.0
    %1548 = vmatprep.subr.mxu0 0.0
    %1549 = vmatpush1.msra.mxu0 0.0
    %1550 = vmatprep.subr.mxu0 0.0
    %1551 = vmatpush1.msra.mxu0 0.0
    %1552 = vmatprep.subr.mxu0 0.0
    %1553 = vmatpush1.msra.mxu0 0.0
    %1554 = vmatprep.subr.mxu0 0.0
    %1555 = vmatpush1.msra.mxu0 0.0
    %1556 = vmatprep.mubr.f32.mxu0 0.0
    %1557 = vmatmul.mubr.f32.gmra.mrb[0].mxu0 %v273
    %v1558 = vpop.f32.mrb[0].mxu0
    %v1559 = vadd.f32 0.0, %v1558
    %v1560 = vpop.f32.mrb[0].mxu0
    %1561 = vmatprep.mubr.f32.mxu0 0.0
    %1562 = vmatmul.mubr.f32.gmra.mrb[0].mxu0 %v276
    %v1563 = vpop.f32.mrb[0].mxu0
    %v1564 = vadd.f32 0.0, %v1563
    %v1565 = vpop.f32.mrb[0].mxu0
    %1566 = vmatprep.mubr.f32.mxu0 0.0
    %1567 = vmatmul.mubr.f32.gmra.mrb[0].mxu0 %v279
    %v1568 = vpop.f32.mrb[0].mxu0
    %v1569 = vadd.f32 0.0, %v1568
    %v1570 = vpop.f32.mrb[0].mxu0
    %1571 = vmatprep.mubr.f32.mxu0 0.0
    %1572 = vmatmul.mubr.f32.gmra.mrb[0].mxu0 %v282
    %v1573 = vpop.f32.mrb[0].mxu0
    %v1574 = vadd.f32 0.0, %v1573
    %v1575 = vpop.f32.mrb[0].mxu0
    %1576 = vmatprep.mubr.f32.mxu0 0.0
    %1577 = vmatmul.mubr.f32.gmra.mrb[0].mxu0 %v285
    %v1578 = vpop.f32.mrb[0].mxu0
    %v1579 = vadd.f32 0.0, %v1578
    %v1580 = vpop.f32.mrb[0].mxu0
    %1581 = vmatprep.mubr.f32.mxu0 0.0
    %1582 = vmatmul.mubr.f32.gmra.mrb[0].mxu0 %v288
    %v1583 = vpop.f32.mrb[0].mxu0
    %v1584 = vadd.f32 0.0, %v1583
    %v1585 = vpop.f32.mrb[0].mxu0
    %1586 = vmatprep.mubr.f32.mxu0 0.0
    %1587 = vmatmul.mubr.f32.gmra.mrb[0].mxu0 %v291
    %v1588 = vpop.f32.mrb[0].mxu0
    %v1589 = vadd.f32 0.0, %v1588
    %v1590 = vpop.f32.mrb[0].mxu0
    %1591 = vmatprep.mubr.f32.mxu0 0.0
    %1592 = vmatmul.mubr.f32.gmra.mrb[0].mxu0 %v294
    %v1593 = vpop.f32.mrb[0].mxu0
    %v1594 = vadd.f32 0.0, %v1593
    %v1595 = vpop.f32.mrb[0].mxu0
    %1596 = vmatprep.mubr.f32.mxu0 0.0
    %1597 = vmatmul.mubr.f32.gmra.mrb[0].mxu0 %v297
    %v1598 = vpop.f32.mrb[0].mxu0
    %v1599 = vadd.f32 0.0, %v1598
    %v1600 = vpop.f32.mrb[0].mxu0
    %1601 = vmatprep.mubr.f32.mxu0 0.0
    %1602 = vmatmul.mubr.f32.gmra.mrb[0].mxu0 %v300
    %v1603 = vpop.f32.mrb[0].mxu0
    %v1604 = vadd.f32 0.0, %v1603
    %v1605 = vpop.f32.mrb[0].mxu0
    %1606 = vmatprep.mubr.f32.mxu0 0.0
    %1607 = vmatmul.mubr.f32.gmra.mrb[0].mxu0 %v303
    %v1608 = vpop.f32.mrb[0].mxu0
    %v1609 = vadd.f32 0.0, %v1608
    %v1610 = vpop.f32.mrb[0].mxu0
    %1611 = vmatprep.mubr.f32.mxu0 0.0
    %1612 = vmatmul.mubr.f32.gmra.mrb[0].mxu0 %v306
    %v1613 = vpop.f32.mrb[0].mxu0
    %v1614 = vadd.f32 0.0, %v1613
    %v1615 = vpop.f32.mrb[0].mxu0
    %1616 = vmatprep.mubr.f32.mxu0 0.0
    %1617 = vmatmul.mubr.f32.gmra.mrb[0].mxu0 %v309
    %v1618 = vpop.f32.mrb[0].mxu0
    %v1619 = vadd.f32 0.0, %v1618
    %v1620 = vpop.f32.mrb[0].mxu0
    %1621 = vmatprep.mubr.f32.mxu0 0.0
    %1622 = vmatmul.mubr.f32.gmra.mrb[0].mxu0 %v312
    %v1623 = vpop.f32.mrb[0].mxu0
    %v1624 = vadd.f32 0.0, %v1623
    %v1625 = vpop.f32.mrb[0].mxu0
    %1626 = vmatprep.mubr.f32.mxu0 0.0
    %1627 = vmatmul.mubr.f32.gmra.mrb[0].mxu0 %v315
    %v1628 = vpop.f32.mrb[0].mxu0
    %v1629 = vadd.f32 0.0, %v1628
    %v1630 = vpop.f32.mrb[0].mxu0
    %1631 = vmatprep.mubr.f32.mxu0 0.0
    %1632 = vmatmul.mubr.f32.gmra.mrb[0].mxu0 %v318
    %v1633 = vpop.f32.mrb[0].mxu0
    %v1634 = vadd.f32 0.0, %v1633
    %v1635 = vpop.f32.mrb[0].mxu0
    %1636 = vdwg.mxu0
    %v1637 = vadd.f32 %v1476, %v1559
    %v1638 = vadd.f32 %v1477, %v1564
    %v1639 = vadd.f32 %v1478, %v1569
    %v1640 = vadd.f32 %v1479, %v1574
    %v1641 = vadd.f32 %v1480, %v1579
    %v1642 = vadd.f32 %v1481, %v1584
    %v1643 = vadd.f32 %v1482, %v1589
    %v1644 = vadd.f32 %v1483, %v1594
    %v1645 = vadd.f32 %v1484, %v1599
    %v1646 = vadd.f32 %v1485, %v1604
    %v1647 = vadd.f32 %v1486, %v1609
    %v1648 = vadd.f32 %v1487, %v1614
    %v1649 = vadd.f32 %v1488, %v1619
    %v1650 = vadd.f32 %v1489, %v1624
    %v1651 = vadd.f32 %v1490, %v1629
    %v1652 = vadd.f32 %v1491, %v1634
    %v1653 = vxor.u32 %v1637, 2147483648
    %v1654 = vxor.u32 %v1638, 2147483648
    %v1655 = vxor.u32 %v1639, 2147483648
    %v1656 = vxor.u32 %v1640, 2147483648
    %v1657 = vxor.u32 %v1641, 2147483648
    %v1658 = vxor.u32 %v1642, 2147483648
    %v1659 = vxor.u32 %v1643, 2147483648
    %v1660 = vxor.u32 %v1644, 2147483648
    %v1661 = vmul.f32 %v1653, 1.442695
    %v1662 = vpow.pop %v1661
    %v1663 = vmul.f32 %v1654, 1.442695
    %v1664 = vpow.pop %v1663
    %v1665 = vmul.f32 %v1655, 1.442695
    %v1666 = vpow.pop %v1665
    %v1667 = vmul.f32 %v1656, 1.442695
    %v1668 = vpow.pop %v1667
    %v1669 = vmul.f32 %v1657, 1.442695
    %v1670 = vpow.pop %v1669
    %v1671 = vmul.f32 %v1658, 1.442695
    %v1672 = vpow.pop %v1671
    %v1673 = vmul.f32 %v1659, 1.442695
    %v1674 = vpow.pop %v1673
    %v1675 = vmul.f32 %v1660, 1.442695
    %v1676 = vpow.pop %v1675
    %v1677 = vadd.f32 %v1662, 1.0
    %v1678 = vadd.f32 %v1664, 1.0
    %v1679 = vadd.f32 %v1666, 1.0
    %v1680 = vadd.f32 %v1668, 1.0
    %v1681 = vadd.f32 %v1670, 1.0
    %v1682 = vadd.f32 %v1672, 1.0
    %v1683 = vadd.f32 %v1674, 1.0
    %v1684 = vadd.f32 %v1676, 1.0
    %v1685 = vrcp.pop %v1677
    %v1686 = vmul.f32 1.0, %v1685
    %v1687 = vrcp.pop %v1678
    %v1688 = vmul.f32 1.0, %v1687
    %v1689 = vrcp.pop %v1679
    %v1690 = vmul.f32 1.0, %v1689
    %v1691 = vrcp.pop %v1680
    %v1692 = vmul.f32 1.0, %v1691
    %v1693 = vrcp.pop %v1681
    %v1694 = vmul.f32 1.0, %v1693
    %v1695 = vrcp.pop %v1682
    %v1696 = vmul.f32 1.0, %v1695
    %v1697 = vrcp.pop %v1683
    %v1698 = vmul.f32 1.0, %v1697
    %v1699 = vrcp.pop %v1684
    %v1700 = vmul.f32 1.0, %v1699
    %v1701 = vtanh.pop %v1645
    %v1702 = vtanh.pop %v1646
    %v1703 = vtanh.pop %v1647
    %v1704 = vtanh.pop %v1648
    %v1705 = vxor.u32 %v1649, 2147483648
    %v1706 = vxor.u32 %v1650, 2147483648
    %v1707 = vxor.u32 %v1651, 2147483648
    %v1708 = vxor.u32 %v1652, 2147483648
    %v1709 = vmul.f32 %v1705, 1.442695
    %v1710 = vpow.pop %v1709
    %v1711 = vmul.f32 %v1706, 1.442695
    %v1712 = vpow.pop %v1711
    %v1713 = vmul.f32 %v1707, 1.442695
    %v1714 = vpow.pop %v1713
    %v1715 = vmul.f32 %v1708, 1.442695
    %v1716 = vpow.pop %v1715
    %v1717 = vadd.f32 %v1710, 1.0
    %v1718 = vadd.f32 %v1712, 1.0
    %v1719 = vadd.f32 %v1714, 1.0
    %v1720 = vadd.f32 %v1716, 1.0
    %v1721 = vrcp.pop %v1717
    %v1722 = vmul.f32 1.0, %v1721
    %v1723 = vrcp.pop %v1718
    %v1724 = vmul.f32 1.0, %v1723
    %v1725 = vrcp.pop %v1719
    %v1726 = vmul.f32 1.0, %v1725
    %v1727 = vrcp.pop %v1720
    %v1728 = vmul.f32 1.0, %v1727
    %v1729 = vmul.f32 %v1694, %v1444
    %v1730 = vmul.f32 %v1696, %v1445
    %v1731 = vmul.f32 %v1698, %v1446
    %v1732 = vmul.f32 %v1700, %v1447
    %v1733 = vmul.f32 %v1686, %v1701
    %v1734 = vmul.f32 %v1688, %v1702
    %v1735 = vmul.f32 %v1690, %v1703
    %v1736 = vmul.f32 %v1692, %v1704
    %v1737 = vadd.f32 %v1729, %v1733
    %v1738 = vadd.f32 %v1730, %v1734
    %v1739 = vadd.f32 %v1731, %v1735
    %v1740 = vadd.f32 %v1732, %v1736
    %v1741 = vtanh.pop %v1737
    %v1742 = vtanh.pop %v1738
    %v1743 = vtanh.pop %v1739
    %v1744 = vtanh.pop %v1740
    %v1745 = vmul.f32 %v1722, %v1741
    %v1746 = vmul.f32 %v1724, %v1742
    %v1747 = vmul.f32 %v1726, %v1743
    %v1748 = vmul.f32 %v1728, %v1744
    %v1749 = vlaneseq
    %v1750 = vshrl.u32 %v1749, 7
    %v1751 = vsub.s32 5, %v1750
    %v1752 = vrot.slane %v26, %v1751
    %v1753 = vmul.f32 %v1752, %v82
    %v1754 = vmul.f32 %v1752, %v87
    %v1755 = vmul.f32 %v1752, %v92
    %v1756 = vmul.f32 %v1752, %v97
    %v1757 = vmul.f32 %v1752, %v102
    %v1758 = vmul.f32 %v1752, %v107
    %v1759 = vmul.f32 %v1752, %v112
    %v1760 = vmul.f32 %v1752, %v117
    %v1761 = vmul.f32 %v1752, %v122
    %v1762 = vmul.f32 %v1752, %v127
    %v1763 = vmul.f32 %v1752, %v132
    %v1764 = vmul.f32 %v1752, %v137
    %v1765 = vmul.f32 %v1752, %v142
    %v1766 = vmul.f32 %v1752, %v147
    %v1767 = vmul.f32 %v1752, %v152
    %v1768 = vmul.f32 %v1752, %v157
    %v1769 = vadd.f32 %v1753, %v178
    %v1770 = vadd.f32 %v1754, %v183
    %v1771 = vadd.f32 %v1755, %v188
    %v1772 = vadd.f32 %v1756, %v193
    %v1773 = vadd.f32 %v1757, %v198
    %v1774 = vadd.f32 %v1758, %v203
    %v1775 = vadd.f32 %v1759, %v208
    %v1776 = vadd.f32 %v1760, %v213
    %v1777 = vadd.f32 %v1761, %v218
    %v1778 = vadd.f32 %v1762, %v223
    %v1779 = vadd.f32 %v1763, %v228
    %v1780 = vadd.f32 %v1764, %v233
    %v1781 = vadd.f32 %v1765, %v238
    %v1782 = vadd.f32 %v1766, %v243
    %v1783 = vadd.f32 %v1767, %v248
    %v1784 = vadd.f32 %v1768, %v253
    %1785 = vmatprep.subr.mxu0 0.0
    %1786 = vmatpush1.msra.mxu0 %v1745
    %1787 = vmatprep.subr.mxu0 0.0
    %1788 = vmatpush1.msra.mxu0 %v1746
    %1789 = vmatprep.subr.mxu0 0.0
    %1790 = vmatpush1.msra.mxu0 %v1747
    %1791 = vmatprep.subr.mxu0 0.0
    %1792 = vmatpush1.msra.mxu0 %v1748
    %1793 = vmatprep.subr.mxu0 0.0
    %1794 = vmatpush1.msra.mxu0 0.0
    %1795 = vmatprep.subr.mxu0 0.0
    %1796 = vmatpush1.msra.mxu0 0.0
    %1797 = vmatprep.subr.mxu0 0.0
    %1798 = vmatpush1.msra.mxu0 0.0
    %1799 = vmatprep.subr.mxu0 0.0
    %1800 = vmatpush1.msra.mxu0 0.0
    %1801 = vmatprep.subr.mxu0 0.0
    %1802 = vmatpush1.msra.mxu0 0.0
    %1803 = vmatprep.subr.mxu0 0.0
    %1804 = vmatpush1.msra.mxu0 0.0
    %1805 = vmatprep.subr.mxu0 0.0
    %1806 = vmatpush1.msra.mxu0 0.0
    %1807 = vmatprep.subr.mxu0 0.0
    %1808 = vmatpush1.msra.mxu0 0.0
    %1809 = vmatprep.subr.mxu0 0.0
    %1810 = vmatpush1.msra.mxu0 0.0
    %1811 = vmatprep.subr.mxu0 0.0
    %1812 = vmatpush1.msra.mxu0 0.0
    %1813 = vmatprep.subr.mxu0 0.0
    %1814 = vmatpush1.msra.mxu0 0.0
    %1815 = vmatprep.subr.mxu0 0.0
    %1816 = vmatpush1.msra.mxu0 0.0
    %1817 = vmatprep.subr.mxu0 0.0
    %1818 = vmatpush1.msra.mxu0 0.0
    %1819 = vmatprep.subr.mxu0 0.0
    %1820 = vmatpush1.msra.mxu0 0.0
    %1821 = vmatprep.subr.mxu0 0.0
    %1822 = vmatpush1.msra.mxu0 0.0
    %1823 = vmatprep.subr.mxu0 0.0
    %1824 = vmatpush1.msra.mxu0 0.0
    %1825 = vmatprep.subr.mxu0 0.0
    %1826 = vmatpush1.msra.mxu0 0.0
    %1827 = vmatprep.subr.mxu0 0.0
    %1828 = vmatpush1.msra.mxu0 0.0
    %1829 = vmatprep.subr.mxu0 0.0
    %1830 = vmatpush1.msra.mxu0 0.0
    %1831 = vmatprep.subr.mxu0 0.0
    %1832 = vmatpush1.msra.mxu0 0.0
    %1833 = vmatprep.subr.mxu0 0.0
    %1834 = vmatpush1.msra.mxu0 0.0
    %1835 = vmatprep.subr.mxu0 0.0
    %1836 = vmatpush1.msra.mxu0 0.0
    %1837 = vmatprep.subr.mxu0 0.0
    %1838 = vmatpush1.msra.mxu0 0.0
    %1839 = vmatprep.subr.mxu0 0.0
    %1840 = vmatpush1.msra.mxu0 0.0
    %1841 = vmatprep.subr.mxu0 0.0
    %1842 = vmatpush1.msra.mxu0 0.0
    %1843 = vmatprep.subr.mxu0 0.0
    %1844 = vmatpush1.msra.mxu0 0.0
    %1845 = vmatprep.subr.mxu0 0.0
    %1846 = vmatpush1.msra.mxu0 0.0
    %1847 = vmatprep.subr.mxu0 0.0
    %1848 = vmatpush1.msra.mxu0 0.0
    %1849 = vmatprep.mubr.f32.mxu0 0.0
    %1850 = vmatmul.mubr.f32.gmra.mrb[0].mxu0 %v273
    %v1851 = vpop.f32.mrb[0].mxu0
    %v1852 = vadd.f32 0.0, %v1851
    %v1853 = vpop.f32.mrb[0].mxu0
    %1854 = vmatprep.mubr.f32.mxu0 0.0
    %1855 = vmatmul.mubr.f32.gmra.mrb[0].mxu0 %v276
    %v1856 = vpop.f32.mrb[0].mxu0
    %v1857 = vadd.f32 0.0, %v1856
    %v1858 = vpop.f32.mrb[0].mxu0
    %1859 = vmatprep.mubr.f32.mxu0 0.0
    %1860 = vmatmul.mubr.f32.gmra.mrb[0].mxu0 %v279
    %v1861 = vpop.f32.mrb[0].mxu0
    %v1862 = vadd.f32 0.0, %v1861
    %v1863 = vpop.f32.mrb[0].mxu0
    %1864 = vmatprep.mubr.f32.mxu0 0.0
    %1865 = vmatmul.mubr.f32.gmra.mrb[0].mxu0 %v282
    %v1866 = vpop.f32.mrb[0].mxu0
    %v1867 = vadd.f32 0.0, %v1866
    %v1868 = vpop.f32.mrb[0].mxu0
    %1869 = vmatprep.mubr.f32.mxu0 0.0
    %1870 = vmatmul.mubr.f32.gmra.mrb[0].mxu0 %v285
    %v1871 = vpop.f32.mrb[0].mxu0
    %v1872 = vadd.f32 0.0, %v1871
    %v1873 = vpop.f32.mrb[0].mxu0
    %1874 = vmatprep.mubr.f32.mxu0 0.0
    %1875 = vmatmul.mubr.f32.gmra.mrb[0].mxu0 %v288
    %v1876 = vpop.f32.mrb[0].mxu0
    %v1877 = vadd.f32 0.0, %v1876
    %v1878 = vpop.f32.mrb[0].mxu0
    %1879 = vmatprep.mubr.f32.mxu0 0.0
    %1880 = vmatmul.mubr.f32.gmra.mrb[0].mxu0 %v291
    %v1881 = vpop.f32.mrb[0].mxu0
    %v1882 = vadd.f32 0.0, %v1881
    %v1883 = vpop.f32.mrb[0].mxu0
    %1884 = vmatprep.mubr.f32.mxu0 0.0
    %1885 = vmatmul.mubr.f32.gmra.mrb[0].mxu0 %v294
    %v1886 = vpop.f32.mrb[0].mxu0
    %v1887 = vadd.f32 0.0, %v1886
    %v1888 = vpop.f32.mrb[0].mxu0
    %1889 = vmatprep.mubr.f32.mxu0 0.0
    %1890 = vmatmul.mubr.f32.gmra.mrb[0].mxu0 %v297
    %v1891 = vpop.f32.mrb[0].mxu0
    %v1892 = vadd.f32 0.0, %v1891
    %v1893 = vpop.f32.mrb[0].mxu0
    %1894 = vmatprep.mubr.f32.mxu0 0.0
    %1895 = vmatmul.mubr.f32.gmra.mrb[0].mxu0 %v300
    %v1896 = vpop.f32.mrb[0].mxu0
    %v1897 = vadd.f32 0.0, %v1896
    %v1898 = vpop.f32.mrb[0].mxu0
    %1899 = vmatprep.mubr.f32.mxu0 0.0
    %1900 = vmatmul.mubr.f32.gmra.mrb[0].mxu0 %v303
    %v1901 = vpop.f32.mrb[0].mxu0
    %v1902 = vadd.f32 0.0, %v1901
    %v1903 = vpop.f32.mrb[0].mxu0
    %1904 = vmatprep.mubr.f32.mxu0 0.0
    %1905 = vmatmul.mubr.f32.gmra.mrb[0].mxu0 %v306
    %v1906 = vpop.f32.mrb[0].mxu0
    %v1907 = vadd.f32 0.0, %v1906
    %v1908 = vpop.f32.mrb[0].mxu0
    %1909 = vmatprep.mubr.f32.mxu0 0.0
    %1910 = vmatmul.mubr.f32.gmra.mrb[0].mxu0 %v309
    %v1911 = vpop.f32.mrb[0].mxu0
    %v1912 = vadd.f32 0.0, %v1911
    %v1913 = vpop.f32.mrb[0].mxu0
    %1914 = vmatprep.mubr.f32.mxu0 0.0
    %1915 = vmatmul.mubr.f32.gmra.mrb[0].mxu0 %v312
    %v1916 = vpop.f32.mrb[0].mxu0
    %v1917 = vadd.f32 0.0, %v1916
    %v1918 = vpop.f32.mrb[0].mxu0
    %1919 = vmatprep.mubr.f32.mxu0 0.0
    %1920 = vmatmul.mubr.f32.gmra.mrb[0].mxu0 %v315
    %v1921 = vpop.f32.mrb[0].mxu0
    %v1922 = vadd.f32 0.0, %v1921
    %v1923 = vpop.f32.mrb[0].mxu0
    %1924 = vmatprep.mubr.f32.mxu0 0.0
    %1925 = vmatmul.mubr.f32.gmra.mrb[0].mxu0 %v318
    %v1926 = vpop.f32.mrb[0].mxu0
    %v1927 = vadd.f32 0.0, %v1926
    %v1928 = vpop.f32.mrb[0].mxu0
    %1929 = vdwg.mxu0
    %v1930 = vadd.f32 %v1769, %v1852
    %v1931 = vadd.f32 %v1770, %v1857
    %v1932 = vadd.f32 %v1771, %v1862
    %v1933 = vadd.f32 %v1772, %v1867
    %v1934 = vadd.f32 %v1773, %v1872
    %v1935 = vadd.f32 %v1774, %v1877
    %v1936 = vadd.f32 %v1775, %v1882
    %v1937 = vadd.f32 %v1776, %v1887
    %v1938 = vadd.f32 %v1777, %v1892
    %v1939 = vadd.f32 %v1778, %v1897
    %v1940 = vadd.f32 %v1779, %v1902
    %v1941 = vadd.f32 %v1780, %v1907
    %v1942 = vadd.f32 %v1781, %v1912
    %v1943 = vadd.f32 %v1782, %v1917
    %v1944 = vadd.f32 %v1783, %v1922
    %v1945 = vadd.f32 %v1784, %v1927
    %v1946 = vxor.u32 %v1930, 2147483648
    %v1947 = vxor.u32 %v1931, 2147483648
    %v1948 = vxor.u32 %v1932, 2147483648
    %v1949 = vxor.u32 %v1933, 2147483648
    %v1950 = vxor.u32 %v1934, 2147483648
    %v1951 = vxor.u32 %v1935, 2147483648
    %v1952 = vxor.u32 %v1936, 2147483648
    %v1953 = vxor.u32 %v1937, 2147483648
    %v1954 = vmul.f32 %v1946, 1.442695
    %v1955 = vpow.pop %v1954
    %v1956 = vmul.f32 %v1947, 1.442695
    %v1957 = vpow.pop %v1956
    %v1958 = vmul.f32 %v1948, 1.442695
    %v1959 = vpow.pop %v1958
    %v1960 = vmul.f32 %v1949, 1.442695
    %v1961 = vpow.pop %v1960
    %v1962 = vmul.f32 %v1950, 1.442695
    %v1963 = vpow.pop %v1962
    %v1964 = vmul.f32 %v1951, 1.442695
    %v1965 = vpow.pop %v1964
    %v1966 = vmul.f32 %v1952, 1.442695
    %v1967 = vpow.pop %v1966
    %v1968 = vmul.f32 %v1953, 1.442695
    %v1969 = vpow.pop %v1968
    %v1970 = vadd.f32 %v1955, 1.0
    %v1971 = vadd.f32 %v1957, 1.0
    %v1972 = vadd.f32 %v1959, 1.0
    %v1973 = vadd.f32 %v1961, 1.0
    %v1974 = vadd.f32 %v1963, 1.0
    %v1975 = vadd.f32 %v1965, 1.0
    %v1976 = vadd.f32 %v1967, 1.0
    %v1977 = vadd.f32 %v1969, 1.0
    %v1978 = vrcp.pop %v1970
    %v1979 = vmul.f32 1.0, %v1978
    %v1980 = vrcp.pop %v1971
    %v1981 = vmul.f32 1.0, %v1980
    %v1982 = vrcp.pop %v1972
    %v1983 = vmul.f32 1.0, %v1982
    %v1984 = vrcp.pop %v1973
    %v1985 = vmul.f32 1.0, %v1984
    %v1986 = vrcp.pop %v1974
    %v1987 = vmul.f32 1.0, %v1986
    %v1988 = vrcp.pop %v1975
    %v1989 = vmul.f32 1.0, %v1988
    %v1990 = vrcp.pop %v1976
    %v1991 = vmul.f32 1.0, %v1990
    %v1992 = vrcp.pop %v1977
    %v1993 = vmul.f32 1.0, %v1992
    %v1994 = vtanh.pop %v1938
    %v1995 = vtanh.pop %v1939
    %v1996 = vtanh.pop %v1940
    %v1997 = vtanh.pop %v1941
    %v1998 = vxor.u32 %v1942, 2147483648
    %v1999 = vxor.u32 %v1943, 2147483648
    %v2000 = vxor.u32 %v1944, 2147483648
    %v2001 = vxor.u32 %v1945, 2147483648
    %v2002 = vmul.f32 %v1998, 1.442695
    %v2003 = vpow.pop %v2002
    %v2004 = vmul.f32 %v1999, 1.442695
    %v2005 = vpow.pop %v2004
    %v2006 = vmul.f32 %v2000, 1.442695
    %v2007 = vpow.pop %v2006
    %v2008 = vmul.f32 %v2001, 1.442695
    %v2009 = vpow.pop %v2008
    %v2010 = vadd.f32 %v2003, 1.0
    %v2011 = vadd.f32 %v2005, 1.0
    %v2012 = vadd.f32 %v2007, 1.0
    %v2013 = vadd.f32 %v2009, 1.0
    %v2014 = vrcp.pop %v2010
    %v2015 = vmul.f32 1.0, %v2014
    %v2016 = vrcp.pop %v2011
    %v2017 = vmul.f32 1.0, %v2016
    %v2018 = vrcp.pop %v2012
    %v2019 = vmul.f32 1.0, %v2018
    %v2020 = vrcp.pop %v2013
    %v2021 = vmul.f32 1.0, %v2020
    %v2022 = vmul.f32 %v1987, %v1737
    %v2023 = vmul.f32 %v1989, %v1738
    %v2024 = vmul.f32 %v1991, %v1739
    %v2025 = vmul.f32 %v1993, %v1740
    %v2026 = vmul.f32 %v1979, %v1994
    %v2027 = vmul.f32 %v1981, %v1995
    %v2028 = vmul.f32 %v1983, %v1996
    %v2029 = vmul.f32 %v1985, %v1997
    %v2030 = vadd.f32 %v2022, %v2026
    %v2031 = vadd.f32 %v2023, %v2027
    %v2032 = vadd.f32 %v2024, %v2028
    %v2033 = vadd.f32 %v2025, %v2029
    %v2034 = vtanh.pop %v2030
    %v2035 = vtanh.pop %v2031
    %v2036 = vtanh.pop %v2032
    %v2037 = vtanh.pop %v2033
    %v2038 = vmul.f32 %v2015, %v2034
    %v2039 = vmul.f32 %v2017, %v2035
    %v2040 = vmul.f32 %v2019, %v2036
    %v2041 = vmul.f32 %v2021, %v2037
    %v2042 = vlaneseq
    %v2043 = vshrl.u32 %v2042, 7
    %v2044 = vsub.s32 6, %v2043
    %v2045 = vrot.slane %v26, %v2044
    %v2046 = vmul.f32 %v2045, %v82
    %v2047 = vmul.f32 %v2045, %v87
    %v2048 = vmul.f32 %v2045, %v92
    %v2049 = vmul.f32 %v2045, %v97
    %v2050 = vmul.f32 %v2045, %v102
    %v2051 = vmul.f32 %v2045, %v107
    %v2052 = vmul.f32 %v2045, %v112
    %v2053 = vmul.f32 %v2045, %v117
    %v2054 = vmul.f32 %v2045, %v122
    %v2055 = vmul.f32 %v2045, %v127
    %v2056 = vmul.f32 %v2045, %v132
    %v2057 = vmul.f32 %v2045, %v137
    %v2058 = vmul.f32 %v2045, %v142
    %v2059 = vmul.f32 %v2045, %v147
    %v2060 = vmul.f32 %v2045, %v152
    %v2061 = vmul.f32 %v2045, %v157
    %v2062 = vadd.f32 %v2046, %v178
    %v2063 = vadd.f32 %v2047, %v183
    %v2064 = vadd.f32 %v2048, %v188
    %v2065 = vadd.f32 %v2049, %v193
    %v2066 = vadd.f32 %v2050, %v198
    %v2067 = vadd.f32 %v2051, %v203
    %v2068 = vadd.f32 %v2052, %v208
    %v2069 = vadd.f32 %v2053, %v213
    %v2070 = vadd.f32 %v2054, %v218
    %v2071 = vadd.f32 %v2055, %v223
    %v2072 = vadd.f32 %v2056, %v228
    %v2073 = vadd.f32 %v2057, %v233
    %v2074 = vadd.f32 %v2058, %v238
    %v2075 = vadd.f32 %v2059, %v243
    %v2076 = vadd.f32 %v2060, %v248
    %v2077 = vadd.f32 %v2061, %v253
    %2078 = vmatprep.subr.mxu0 0.0
    %2079 = vmatpush1.msra.mxu0 %v2038
    %2080 = vmatprep.subr.mxu0 0.0
    %2081 = vmatpush1.msra.mxu0 %v2039
    %2082 = vmatprep.subr.mxu0 0.0
    %2083 = vmatpush1.msra.mxu0 %v2040
    %2084 = vmatprep.subr.mxu0 0.0
    %2085 = vmatpush1.msra.mxu0 %v2041
    %2086 = vmatprep.subr.mxu0 0.0
    %2087 = vmatpush1.msra.mxu0 0.0
    %2088 = vmatprep.subr.mxu0 0.0
    %2089 = vmatpush1.msra.mxu0 0.0
    %2090 = vmatprep.subr.mxu0 0.0
    %2091 = vmatpush1.msra.mxu0 0.0
    %2092 = vmatprep.subr.mxu0 0.0
    %2093 = vmatpush1.msra.mxu0 0.0
    %2094 = vmatprep.subr.mxu0 0.0
    %2095 = vmatpush1.msra.mxu0 0.0
    %2096 = vmatprep.subr.mxu0 0.0
    %2097 = vmatpush1.msra.mxu0 0.0
    %2098 = vmatprep.subr.mxu0 0.0
    %2099 = vmatpush1.msra.mxu0 0.0
    %2100 = vmatprep.subr.mxu0 0.0
    %2101 = vmatpush1.msra.mxu0 0.0
    %2102 = vmatprep.subr.mxu0 0.0
    %2103 = vmatpush1.msra.mxu0 0.0
    %2104 = vmatprep.subr.mxu0 0.0
    %2105 = vmatpush1.msra.mxu0 0.0
    %2106 = vmatprep.subr.mxu0 0.0
    %2107 = vmatpush1.msra.mxu0 0.0
    %2108 = vmatprep.subr.mxu0 0.0
    %2109 = vmatpush1.msra.mxu0 0.0
    %2110 = vmatprep.subr.mxu0 0.0
    %2111 = vmatpush1.msra.mxu0 0.0
    %2112 = vmatprep.subr.mxu0 0.0
    %2113 = vmatpush1.msra.mxu0 0.0
    %2114 = vmatprep.subr.mxu0 0.0
    %2115 = vmatpush1.msra.mxu0 0.0
    %2116 = vmatprep.subr.mxu0 0.0
    %2117 = vmatpush1.msra.mxu0 0.0
    %2118 = vmatprep.subr.mxu0 0.0
    %2119 = vmatpush1.msra.mxu0 0.0
    %2120 = vmatprep.subr.mxu0 0.0
    %2121 = vmatpush1.msra.mxu0 0.0
    %2122 = vmatprep.subr.mxu0 0.0
    %2123 = vmatpush1.msra.mxu0 0.0
    %2124 = vmatprep.subr.mxu0 0.0
    %2125 = vmatpush1.msra.mxu0 0.0
    %2126 = vmatprep.subr.mxu0 0.0
    %2127 = vmatpush1.msra.mxu0 0.0
    %2128 = vmatprep.subr.mxu0 0.0
    %2129 = vmatpush1.msra.mxu0 0.0
    %2130 = vmatprep.subr.mxu0 0.0
    %2131 = vmatpush1.msra.mxu0 0.0
    %2132 = vmatprep.subr.mxu0 0.0
    %2133 = vmatpush1.msra.mxu0 0.0
    %2134 = vmatprep.subr.mxu0 0.0
    %2135 = vmatpush1.msra.mxu0 0.0
    %2136 = vmatprep.subr.mxu0 0.0
    %2137 = vmatpush1.msra.mxu0 0.0
    %2138 = vmatprep.subr.mxu0 0.0
    %2139 = vmatpush1.msra.mxu0 0.0
    %2140 = vmatprep.subr.mxu0 0.0
    %2141 = vmatpush1.msra.mxu0 0.0
    %2142 = vmatprep.mubr.f32.mxu0 0.0
    %2143 = vmatmul.mubr.f32.gmra.mrb[0].mxu0 %v273
    %v2144 = vpop.f32.mrb[0].mxu0
    %v2145 = vadd.f32 0.0, %v2144
    %v2146 = vpop.f32.mrb[0].mxu0
    %2147 = vmatprep.mubr.f32.mxu0 0.0
    %2148 = vmatmul.mubr.f32.gmra.mrb[0].mxu0 %v276
    %v2149 = vpop.f32.mrb[0].mxu0
    %v2150 = vadd.f32 0.0, %v2149
    %v2151 = vpop.f32.mrb[0].mxu0
    %2152 = vmatprep.mubr.f32.mxu0 0.0
    %2153 = vmatmul.mubr.f32.gmra.mrb[0].mxu0 %v279
    %v2154 = vpop.f32.mrb[0].mxu0
    %v2155 = vadd.f32 0.0, %v2154
    %v2156 = vpop.f32.mrb[0].mxu0
    %2157 = vmatprep.mubr.f32.mxu0 0.0
    %2158 = vmatmul.mubr.f32.gmra.mrb[0].mxu0 %v282
    %v2159 = vpop.f32.mrb[0].mxu0
    %v2160 = vadd.f32 0.0, %v2159
    %v2161 = vpop.f32.mrb[0].mxu0
    %2162 = vmatprep.mubr.f32.mxu0 0.0
    %2163 = vmatmul.mubr.f32.gmra.mrb[0].mxu0 %v285
    %v2164 = vpop.f32.mrb[0].mxu0
    %v2165 = vadd.f32 0.0, %v2164
    %v2166 = vpop.f32.mrb[0].mxu0
    %2167 = vmatprep.mubr.f32.mxu0 0.0
    %2168 = vmatmul.mubr.f32.gmra.mrb[0].mxu0 %v288
    %v2169 = vpop.f32.mrb[0].mxu0
    %v2170 = vadd.f32 0.0, %v2169
    %v2171 = vpop.f32.mrb[0].mxu0
    %2172 = vmatprep.mubr.f32.mxu0 0.0
    %2173 = vmatmul.mubr.f32.gmra.mrb[0].mxu0 %v291
    %v2174 = vpop.f32.mrb[0].mxu0
    %v2175 = vadd.f32 0.0, %v2174
    %v2176 = vpop.f32.mrb[0].mxu0
    %2177 = vmatprep.mubr.f32.mxu0 0.0
    %2178 = vmatmul.mubr.f32.gmra.mrb[0].mxu0 %v294
    %v2179 = vpop.f32.mrb[0].mxu0
    %v2180 = vadd.f32 0.0, %v2179
    %v2181 = vpop.f32.mrb[0].mxu0
    %2182 = vmatprep.mubr.f32.mxu0 0.0
    %2183 = vmatmul.mubr.f32.gmra.mrb[0].mxu0 %v297
    %v2184 = vpop.f32.mrb[0].mxu0
    %v2185 = vadd.f32 0.0, %v2184
    %v2186 = vpop.f32.mrb[0].mxu0
    %2187 = vmatprep.mubr.f32.mxu0 0.0
    %2188 = vmatmul.mubr.f32.gmra.mrb[0].mxu0 %v300
    %v2189 = vpop.f32.mrb[0].mxu0
    %v2190 = vadd.f32 0.0, %v2189
    %v2191 = vpop.f32.mrb[0].mxu0
    %2192 = vmatprep.mubr.f32.mxu0 0.0
    %2193 = vmatmul.mubr.f32.gmra.mrb[0].mxu0 %v303
    %v2194 = vpop.f32.mrb[0].mxu0
    %v2195 = vadd.f32 0.0, %v2194
    %v2196 = vpop.f32.mrb[0].mxu0
    %2197 = vmatprep.mubr.f32.mxu0 0.0
    %2198 = vmatmul.mubr.f32.gmra.mrb[0].mxu0 %v306
    %v2199 = vpop.f32.mrb[0].mxu0
    %v2200 = vadd.f32 0.0, %v2199
    %v2201 = vpop.f32.mrb[0].mxu0
    %2202 = vmatprep.mubr.f32.mxu0 0.0
    %2203 = vmatmul.mubr.f32.gmra.mrb[0].mxu0 %v309
    %v2204 = vpop.f32.mrb[0].mxu0
    %v2205 = vadd.f32 0.0, %v2204
    %v2206 = vpop.f32.mrb[0].mxu0
    %2207 = vmatprep.mubr.f32.mxu0 0.0
    %2208 = vmatmul.mubr.f32.gmra.mrb[0].mxu0 %v312
    %v2209 = vpop.f32.mrb[0].mxu0
    %v2210 = vadd.f32 0.0, %v2209
    %v2211 = vpop.f32.mrb[0].mxu0
    %2212 = vmatprep.mubr.f32.mxu0 0.0
    %2213 = vmatmul.mubr.f32.gmra.mrb[0].mxu0 %v315
    %v2214 = vpop.f32.mrb[0].mxu0
    %v2215 = vadd.f32 0.0, %v2214
    %v2216 = vpop.f32.mrb[0].mxu0
    %2217 = vmatprep.mubr.f32.mxu0 0.0
    %2218 = vmatmul.mubr.f32.gmra.mrb[0].mxu0 %v318
    %v2219 = vpop.f32.mrb[0].mxu0
    %v2220 = vadd.f32 0.0, %v2219
    %v2221 = vpop.f32.mrb[0].mxu0
    %2222 = vdwg.mxu0
    %v2223 = vadd.f32 %v2062, %v2145
    %v2224 = vadd.f32 %v2063, %v2150
    %v2225 = vadd.f32 %v2064, %v2155
    %v2226 = vadd.f32 %v2065, %v2160
    %v2227 = vadd.f32 %v2066, %v2165
    %v2228 = vadd.f32 %v2067, %v2170
    %v2229 = vadd.f32 %v2068, %v2175
    %v2230 = vadd.f32 %v2069, %v2180
    %v2231 = vadd.f32 %v2070, %v2185
    %v2232 = vadd.f32 %v2071, %v2190
    %v2233 = vadd.f32 %v2072, %v2195
    %v2234 = vadd.f32 %v2073, %v2200
    %v2235 = vadd.f32 %v2074, %v2205
    %v2236 = vadd.f32 %v2075, %v2210
    %v2237 = vadd.f32 %v2076, %v2215
    %v2238 = vadd.f32 %v2077, %v2220
    %v2239 = vxor.u32 %v2223, 2147483648
    %v2240 = vxor.u32 %v2224, 2147483648
    %v2241 = vxor.u32 %v2225, 2147483648
    %v2242 = vxor.u32 %v2226, 2147483648
    %v2243 = vxor.u32 %v2227, 2147483648
    %v2244 = vxor.u32 %v2228, 2147483648
    %v2245 = vxor.u32 %v2229, 2147483648
    %v2246 = vxor.u32 %v2230, 2147483648
    %v2247 = vmul.f32 %v2239, 1.442695
    %v2248 = vpow.pop %v2247
    %v2249 = vmul.f32 %v2240, 1.442695
    %v2250 = vpow.pop %v2249
    %v2251 = vmul.f32 %v2241, 1.442695
    %v2252 = vpow.pop %v2251
    %v2253 = vmul.f32 %v2242, 1.442695
    %v2254 = vpow.pop %v2253
    %v2255 = vmul.f32 %v2243, 1.442695
    %v2256 = vpow.pop %v2255
    %v2257 = vmul.f32 %v2244, 1.442695
    %v2258 = vpow.pop %v2257
    %v2259 = vmul.f32 %v2245, 1.442695
    %v2260 = vpow.pop %v2259
    %v2261 = vmul.f32 %v2246, 1.442695
    %v2262 = vpow.pop %v2261
    %v2263 = vadd.f32 %v2248, 1.0
    %v2264 = vadd.f32 %v2250, 1.0
    %v2265 = vadd.f32 %v2252, 1.0
    %v2266 = vadd.f32 %v2254, 1.0
    %v2267 = vadd.f32 %v2256, 1.0
    %v2268 = vadd.f32 %v2258, 1.0
    %v2269 = vadd.f32 %v2260, 1.0
    %v2270 = vadd.f32 %v2262, 1.0
    %v2271 = vrcp.pop %v2263
    %v2272 = vmul.f32 1.0, %v2271
    %v2273 = vrcp.pop %v2264
    %v2274 = vmul.f32 1.0, %v2273
    %v2275 = vrcp.pop %v2265
    %v2276 = vmul.f32 1.0, %v2275
    %v2277 = vrcp.pop %v2266
    %v2278 = vmul.f32 1.0, %v2277
    %v2279 = vrcp.pop %v2267
    %v2280 = vmul.f32 1.0, %v2279
    %v2281 = vrcp.pop %v2268
    %v2282 = vmul.f32 1.0, %v2281
    %v2283 = vrcp.pop %v2269
    %v2284 = vmul.f32 1.0, %v2283
    %v2285 = vrcp.pop %v2270
    %v2286 = vmul.f32 1.0, %v2285
    %v2287 = vtanh.pop %v2231
    %v2288 = vtanh.pop %v2232
    %v2289 = vtanh.pop %v2233
    %v2290 = vtanh.pop %v2234
    %v2291 = vxor.u32 %v2235, 2147483648
    %v2292 = vxor.u32 %v2236, 2147483648
    %v2293 = vxor.u32 %v2237, 2147483648
    %v2294 = vxor.u32 %v2238, 2147483648
    %v2295 = vmul.f32 %v2291, 1.442695
    %v2296 = vpow.pop %v2295
    %v2297 = vmul.f32 %v2292, 1.442695
    %v2298 = vpow.pop %v2297
    %v2299 = vmul.f32 %v2293, 1.442695
    %v2300 = vpow.pop %v2299
    %v2301 = vmul.f32 %v2294, 1.442695
    %v2302 = vpow.pop %v2301
    %v2303 = vadd.f32 %v2296, 1.0
    %v2304 = vadd.f32 %v2298, 1.0
    %v2305 = vadd.f32 %v2300, 1.0
    %v2306 = vadd.f32 %v2302, 1.0
    %v2307 = vrcp.pop %v2303
    %v2308 = vmul.f32 1.0, %v2307
    %v2309 = vrcp.pop %v2304
    %v2310 = vmul.f32 1.0, %v2309
    %v2311 = vrcp.pop %v2305
    %v2312 = vmul.f32 1.0, %v2311
    %v2313 = vrcp.pop %v2306
    %v2314 = vmul.f32 1.0, %v2313
    %v2315 = vmul.f32 %v2280, %v2030
    %v2316 = vmul.f32 %v2282, %v2031
    %v2317 = vmul.f32 %v2284, %v2032
    %v2318 = vmul.f32 %v2286, %v2033
    %v2319 = vmul.f32 %v2272, %v2287
    %v2320 = vmul.f32 %v2274, %v2288
    %v2321 = vmul.f32 %v2276, %v2289
    %v2322 = vmul.f32 %v2278, %v2290
    %v2323 = vadd.f32 %v2315, %v2319
    %v2324 = vadd.f32 %v2316, %v2320
    %v2325 = vadd.f32 %v2317, %v2321
    %v2326 = vadd.f32 %v2318, %v2322
    %v2327 = vtanh.pop %v2323
    %v2328 = vtanh.pop %v2324
    %v2329 = vtanh.pop %v2325
    %v2330 = vtanh.pop %v2326
    %v2331 = vmul.f32 %v2308, %v2327
    %v2332 = vmul.f32 %v2310, %v2328
    %v2333 = vmul.f32 %v2312, %v2329
    %v2334 = vmul.f32 %v2314, %v2330
    %v2335 = vlaneseq
    %v2336 = vshrl.u32 %v2335, 7
    %v2337 = vsub.s32 7, %v2336
    %v2338 = vrot.slane %v26, %v2337
    %v2339 = vmul.f32 %v2338, %v82
    %v2340 = vmul.f32 %v2338, %v87
    %v2341 = vmul.f32 %v2338, %v92
    %v2342 = vmul.f32 %v2338, %v97
    %v2343 = vmul.f32 %v2338, %v102
    %v2344 = vmul.f32 %v2338, %v107
    %v2345 = vmul.f32 %v2338, %v112
    %v2346 = vmul.f32 %v2338, %v117
    %v2347 = vmul.f32 %v2338, %v122
    %v2348 = vmul.f32 %v2338, %v127
    %v2349 = vmul.f32 %v2338, %v132
    %v2350 = vmul.f32 %v2338, %v137
    %v2351 = vmul.f32 %v2338, %v142
    %v2352 = vmul.f32 %v2338, %v147
    %v2353 = vmul.f32 %v2338, %v152
    %v2354 = vmul.f32 %v2338, %v157
    %v2355 = vadd.f32 %v2339, %v178
    %v2356 = vadd.f32 %v2340, %v183
    %v2357 = vadd.f32 %v2341, %v188
    %v2358 = vadd.f32 %v2342, %v193
    %v2359 = vadd.f32 %v2343, %v198
    %v2360 = vadd.f32 %v2344, %v203
    %v2361 = vadd.f32 %v2345, %v208
    %v2362 = vadd.f32 %v2346, %v213
    %v2363 = vadd.f32 %v2347, %v218
    %v2364 = vadd.f32 %v2348, %v223
    %v2365 = vadd.f32 %v2349, %v228
    %v2366 = vadd.f32 %v2350, %v233
    %v2367 = vadd.f32 %v2351, %v238
    %v2368 = vadd.f32 %v2352, %v243
    %v2369 = vadd.f32 %v2353, %v248
    %v2370 = vadd.f32 %v2354, %v253
    %2371 = vmatprep.subr.mxu0 0.0
    %2372 = vmatpush1.msra.mxu0 %v2331
    %2373 = vmatprep.subr.mxu0 0.0
    %2374 = vmatpush1.msra.mxu0 %v2332
    %2375 = vmatprep.subr.mxu0 0.0
    %2376 = vmatpush1.msra.mxu0 %v2333
    %2377 = vmatprep.subr.mxu0 0.0
    %2378 = vmatpush1.msra.mxu0 %v2334
    %2379 = vmatprep.subr.mxu0 0.0
    %2380 = vmatpush1.msra.mxu0 0.0
    %2381 = vmatprep.subr.mxu0 0.0
    %2382 = vmatpush1.msra.mxu0 0.0
    %2383 = vmatprep.subr.mxu0 0.0
    %2384 = vmatpush1.msra.mxu0 0.0
    %2385 = vmatprep.subr.mxu0 0.0
    %2386 = vmatpush1.msra.mxu0 0.0
    %2387 = vmatprep.subr.mxu0 0.0
    %2388 = vmatpush1.msra.mxu0 0.0
    %2389 = vmatprep.subr.mxu0 0.0
    %2390 = vmatpush1.msra.mxu0 0.0
    %2391 = vmatprep.subr.mxu0 0.0
    %2392 = vmatpush1.msra.mxu0 0.0
    %2393 = vmatprep.subr.mxu0 0.0
    %2394 = vmatpush1.msra.mxu0 0.0
    %2395 = vmatprep.subr.mxu0 0.0
    %2396 = vmatpush1.msra.mxu0 0.0
    %2397 = vmatprep.subr.mxu0 0.0
    %2398 = vmatpush1.msra.mxu0 0.0
    %2399 = vmatprep.subr.mxu0 0.0
    %2400 = vmatpush1.msra.mxu0 0.0
    %2401 = vmatprep.subr.mxu0 0.0
    %2402 = vmatpush1.msra.mxu0 0.0
    %2403 = vmatprep.subr.mxu0 0.0
    %2404 = vmatpush1.msra.mxu0 0.0
    %2405 = vmatprep.subr.mxu0 0.0
    %2406 = vmatpush1.msra.mxu0 0.0
    %2407 = vmatprep.subr.mxu0 0.0
    %2408 = vmatpush1.msra.mxu0 0.0
    %2409 = vmatprep.subr.mxu0 0.0
    %2410 = vmatpush1.msra.mxu0 0.0
    %2411 = vmatprep.subr.mxu0 0.0
    %2412 = vmatpush1.msra.mxu0 0.0
    %2413 = vmatprep.subr.mxu0 0.0
    %2414 = vmatpush1.msra.mxu0 0.0
    %2415 = vmatprep.subr.mxu0 0.0
    %2416 = vmatpush1.msra.mxu0 0.0
    %2417 = vmatprep.subr.mxu0 0.0
    %2418 = vmatpush1.msra.mxu0 0.0
    %2419 = vmatprep.subr.mxu0 0.0
    %2420 = vmatpush1.msra.mxu0 0.0
    %2421 = vmatprep.subr.mxu0 0.0
    %2422 = vmatpush1.msra.mxu0 0.0
    %2423 = vmatprep.subr.mxu0 0.0
    %2424 = vmatpush1.msra.mxu0 0.0
    %2425 = vmatprep.subr.mxu0 0.0
    %2426 = vmatpush1.msra.mxu0 0.0
    %2427 = vmatprep.subr.mxu0 0.0
    %2428 = vmatpush1.msra.mxu0 0.0
    %2429 = vmatprep.subr.mxu0 0.0
    %2430 = vmatpush1.msra.mxu0 0.0
    %2431 = vmatprep.subr.mxu0 0.0
    %2432 = vmatpush1.msra.mxu0 0.0
    %2433 = vmatprep.subr.mxu0 0.0
    %2434 = vmatpush1.msra.mxu0 0.0
    %2435 = vmatprep.mubr.f32.mxu0 0.0
    %2436 = vmatmul.mubr.f32.gmra.mrb[0].mxu0 %v273
    %v2437 = vpop.f32.mrb[0].mxu0
    %v2438 = vadd.f32 0.0, %v2437
    %v2439 = vpop.f32.mrb[0].mxu0
    %2440 = vmatprep.mubr.f32.mxu0 0.0
    %2441 = vmatmul.mubr.f32.gmra.mrb[0].mxu0 %v276
    %v2442 = vpop.f32.mrb[0].mxu0
    %v2443 = vadd.f32 0.0, %v2442
    %v2444 = vpop.f32.mrb[0].mxu0
    %2445 = vmatprep.mubr.f32.mxu0 0.0
    %2446 = vmatmul.mubr.f32.gmra.mrb[0].mxu0 %v279
    %v2447 = vpop.f32.mrb[0].mxu0
    %v2448 = vadd.f32 0.0, %v2447
    %v2449 = vpop.f32.mrb[0].mxu0
    %2450 = vmatprep.mubr.f32.mxu0 0.0
    %2451 = vmatmul.mubr.f32.gmra.mrb[0].mxu0 %v282
    %v2452 = vpop.f32.mrb[0].mxu0
    %v2453 = vadd.f32 0.0, %v2452
    %v2454 = vpop.f32.mrb[0].mxu0
    %2455 = vmatprep.mubr.f32.mxu0 0.0
    %2456 = vmatmul.mubr.f32.gmra.mrb[0].mxu0 %v285
    %v2457 = vpop.f32.mrb[0].mxu0
    %v2458 = vadd.f32 0.0, %v2457
    %v2459 = vpop.f32.mrb[0].mxu0
    %2460 = vmatprep.mubr.f32.mxu0 0.0
    %2461 = vmatmul.mubr.f32.gmra.mrb[0].mxu0 %v288
    %v2462 = vpop.f32.mrb[0].mxu0
    %v2463 = vadd.f32 0.0, %v2462
    %v2464 = vpop.f32.mrb[0].mxu0
    %2465 = vmatprep.mubr.f32.mxu0 0.0
    %2466 = vmatmul.mubr.f32.gmra.mrb[0].mxu0 %v291
    %v2467 = vpop.f32.mrb[0].mxu0
    %v2468 = vadd.f32 0.0, %v2467
    %v2469 = vpop.f32.mrb[0].mxu0
    %2470 = vmatprep.mubr.f32.mxu0 0.0
    %2471 = vmatmul.mubr.f32.gmra.mrb[0].mxu0 %v294
    %v2472 = vpop.f32.mrb[0].mxu0
    %v2473 = vadd.f32 0.0, %v2472
    %v2474 = vpop.f32.mrb[0].mxu0
    %2475 = vmatprep.mubr.f32.mxu0 0.0
    %2476 = vmatmul.mubr.f32.gmra.mrb[0].mxu0 %v297
    %v2477 = vpop.f32.mrb[0].mxu0
    %v2478 = vadd.f32 0.0, %v2477
    %v2479 = vpop.f32.mrb[0].mxu0
    %2480 = vmatprep.mubr.f32.mxu0 0.0
    %2481 = vmatmul.mubr.f32.gmra.mrb[0].mxu0 %v300
    %v2482 = vpop.f32.mrb[0].mxu0
    %v2483 = vadd.f32 0.0, %v2482
    %v2484 = vpop.f32.mrb[0].mxu0
    %2485 = vmatprep.mubr.f32.mxu0 0.0
    %2486 = vmatmul.mubr.f32.gmra.mrb[0].mxu0 %v303
    %v2487 = vpop.f32.mrb[0].mxu0
    %v2488 = vadd.f32 0.0, %v2487
    %v2489 = vpop.f32.mrb[0].mxu0
    %2490 = vmatprep.mubr.f32.mxu0 0.0
    %2491 = vmatmul.mubr.f32.gmra.mrb[0].mxu0 %v306
    %v2492 = vpop.f32.mrb[0].mxu0
    %v2493 = vadd.f32 0.0, %v2492
    %v2494 = vpop.f32.mrb[0].mxu0
    %2495 = vmatprep.mubr.f32.mxu0 0.0
    %2496 = vmatmul.mubr.f32.gmra.mrb[0].mxu0 %v309
    %v2497 = vpop.f32.mrb[0].mxu0
    %v2498 = vadd.f32 0.0, %v2497
    %v2499 = vpop.f32.mrb[0].mxu0
    %2500 = vmatprep.mubr.f32.mxu0 0.0
    %2501 = vmatmul.mubr.f32.gmra.mrb[0].mxu0 %v312
    %v2502 = vpop.f32.mrb[0].mxu0
    %v2503 = vadd.f32 0.0, %v2502
    %v2504 = vpop.f32.mrb[0].mxu0
    %2505 = vmatprep.mubr.f32.mxu0 0.0
    %2506 = vmatmul.mubr.f32.gmra.mrb[0].mxu0 %v315
    %v2507 = vpop.f32.mrb[0].mxu0
    %v2508 = vadd.f32 0.0, %v2507
    %v2509 = vpop.f32.mrb[0].mxu0
    %2510 = vmatprep.mubr.f32.mxu0 0.0
    %2511 = vmatmul.mubr.f32.gmra.mrb[0].mxu0 %v318
    %v2512 = vpop.f32.mrb[0].mxu0
    %v2513 = vadd.f32 0.0, %v2512
    %v2514 = vpop.f32.mrb[0].mxu0
    %2515 = vdwg.mxu0
    %v2516 = vadd.f32 %v2355, %v2438
    %v2517 = vadd.f32 %v2356, %v2443
    %v2518 = vadd.f32 %v2357, %v2448
    %v2519 = vadd.f32 %v2358, %v2453
    %v2520 = vadd.f32 %v2359, %v2458
    %v2521 = vadd.f32 %v2360, %v2463
    %v2522 = vadd.f32 %v2361, %v2468
    %v2523 = vadd.f32 %v2362, %v2473
    %v2524 = vadd.f32 %v2363, %v2478
    %v2525 = vadd.f32 %v2364, %v2483
    %v2526 = vadd.f32 %v2365, %v2488
    %v2527 = vadd.f32 %v2366, %v2493
    %v2528 = vadd.f32 %v2367, %v2498
    %v2529 = vadd.f32 %v2368, %v2503
    %v2530 = vadd.f32 %v2369, %v2508
    %v2531 = vadd.f32 %v2370, %v2513
    %v2532 = vxor.u32 %v2516, 2147483648
    %v2533 = vxor.u32 %v2517, 2147483648
    %v2534 = vxor.u32 %v2518, 2147483648
    %v2535 = vxor.u32 %v2519, 2147483648
    %v2536 = vxor.u32 %v2520, 2147483648
    %v2537 = vxor.u32 %v2521, 2147483648
    %v2538 = vxor.u32 %v2522, 2147483648
    %v2539 = vxor.u32 %v2523, 2147483648
    %v2540 = vmul.f32 %v2532, 1.442695
    %v2541 = vpow.pop %v2540
    %v2542 = vmul.f32 %v2533, 1.442695
    %v2543 = vpow.pop %v2542
    %v2544 = vmul.f32 %v2534, 1.442695
    %v2545 = vpow.pop %v2544
    %v2546 = vmul.f32 %v2535, 1.442695
    %v2547 = vpow.pop %v2546
    %v2548 = vmul.f32 %v2536, 1.442695
    %v2549 = vpow.pop %v2548
    %v2550 = vmul.f32 %v2537, 1.442695
    %v2551 = vpow.pop %v2550
    %v2552 = vmul.f32 %v2538, 1.442695
    %v2553 = vpow.pop %v2552
    %v2554 = vmul.f32 %v2539, 1.442695
    %v2555 = vpow.pop %v2554
    %v2556 = vadd.f32 %v2541, 1.0
    %v2557 = vadd.f32 %v2543, 1.0
    %v2558 = vadd.f32 %v2545, 1.0
    %v2559 = vadd.f32 %v2547, 1.0
    %v2560 = vadd.f32 %v2549, 1.0
    %v2561 = vadd.f32 %v2551, 1.0
    %v2562 = vadd.f32 %v2553, 1.0
    %v2563 = vadd.f32 %v2555, 1.0
    %v2564 = vrcp.pop %v2556
    %v2565 = vmul.f32 1.0, %v2564
    %v2566 = vrcp.pop %v2557
    %v2567 = vmul.f32 1.0, %v2566
    %v2568 = vrcp.pop %v2558
    %v2569 = vmul.f32 1.0, %v2568
    %v2570 = vrcp.pop %v2559
    %v2571 = vmul.f32 1.0, %v2570
    %v2572 = vrcp.pop %v2560
    %v2573 = vmul.f32 1.0, %v2572
    %v2574 = vrcp.pop %v2561
    %v2575 = vmul.f32 1.0, %v2574
    %v2576 = vrcp.pop %v2562
    %v2577 = vmul.f32 1.0, %v2576
    %v2578 = vrcp.pop %v2563
    %v2579 = vmul.f32 1.0, %v2578
    %v2580 = vtanh.pop %v2524
    %v2581 = vtanh.pop %v2525
    %v2582 = vtanh.pop %v2526
    %v2583 = vtanh.pop %v2527
    %v2584 = vxor.u32 %v2528, 2147483648
    %v2585 = vxor.u32 %v2529, 2147483648
    %v2586 = vxor.u32 %v2530, 2147483648
    %v2587 = vxor.u32 %v2531, 2147483648
    %v2588 = vmul.f32 %v2584, 1.442695
    %v2589 = vpow.pop %v2588
    %v2590 = vmul.f32 %v2585, 1.442695
    %v2591 = vpow.pop %v2590
    %v2592 = vmul.f32 %v2586, 1.442695
    %v2593 = vpow.pop %v2592
    %v2594 = vmul.f32 %v2587, 1.442695
    %v2595 = vpow.pop %v2594
    %v2596 = vadd.f32 %v2589, 1.0
    %v2597 = vadd.f32 %v2591, 1.0
    %v2598 = vadd.f32 %v2593, 1.0
    %v2599 = vadd.f32 %v2595, 1.0
    %v2600 = vrcp.pop %v2596
    %v2601 = vmul.f32 1.0, %v2600
    %v2602 = vrcp.pop %v2597
    %v2603 = vmul.f32 1.0, %v2602
    %v2604 = vrcp.pop %v2598
    %v2605 = vmul.f32 1.0, %v2604
    %v2606 = vrcp.pop %v2599
    %v2607 = vmul.f32 1.0, %v2606
    %v2608 = vmul.f32 %v2573, %v2323
    %v2609 = vmul.f32 %v2575, %v2324
    %v2610 = vmul.f32 %v2577, %v2325
    %v2611 = vmul.f32 %v2579, %v2326
    %v2612 = vmul.f32 %v2565, %v2580
    %v2613 = vmul.f32 %v2567, %v2581
    %v2614 = vmul.f32 %v2569, %v2582
    %v2615 = vmul.f32 %v2571, %v2583
    %v2616 = vadd.f32 %v2608, %v2612
    %v2617 = vadd.f32 %v2609, %v2613
    %v2618 = vadd.f32 %v2610, %v2614
    %v2619 = vadd.f32 %v2611, %v2615
    %v2620 = vtanh.pop %v2616
    %v2621 = vtanh.pop %v2617
    %v2622 = vtanh.pop %v2618
    %v2623 = vtanh.pop %v2619
    %v2624 = vmul.f32 %v2601, %v2620
    %v2625 = vmul.f32 %v2603, %v2621
    %v2626 = vmul.f32 %v2605, %v2622
    %v2627 = vmul.f32 %v2607, %v2623
    %v2628 = vld [vmem:[%s4] sm:$0x1]
    %v2629 = vld [vmem:[#allocation2] sm:$0x1]
    %2631 = vset.pattern.permute.xlu0 0
    %2632 = vperm.xlu0 %2631, %v2629
    %v2633 = vpop.permute.xlu0 %2632
    %v2635 = vlaneseq
    %v2636 = vshrl.u32 %v2635, 7
    %v2637 = vsub.s32 0, %v2636
    %v2638 = vrot.slane %v2633, %v2637
    %v2640 = vsel %vm271, %v2628, 0
    %2642 = vmatprep.subr.mxu0 0.0
    %2643 = vmatpush1.msra.mxu0 %v2624
    %2644 = vmatprep.subr.mxu0 0.0
    %2645 = vmatpush1.msra.mxu0 %v2625
    %2646 = vmatprep.subr.mxu0 0.0
    %2647 = vmatpush1.msra.mxu0 %v2626
    %2648 = vmatprep.subr.mxu0 0.0
    %2649 = vmatpush1.msra.mxu0 %v2627
    %2650 = vmatprep.subr.mxu0 0.0
    %2651 = vmatpush1.msra.mxu0 0.0
    %2652 = vmatprep.subr.mxu0 0.0
    %2653 = vmatpush1.msra.mxu0 0.0
    %2654 = vmatprep.subr.mxu0 0.0
    %2655 = vmatpush1.msra.mxu0 0.0
    %2656 = vmatprep.subr.mxu0 0.0
    %2657 = vmatpush1.msra.mxu0 0.0
    %2658 = vmatprep.subr.mxu0 0.0
    %2659 = vmatpush1.msra.mxu0 0.0
    %2660 = vmatprep.subr.mxu0 0.0
    %2661 = vmatpush1.msra.mxu0 0.0
    %2662 = vmatprep.subr.mxu0 0.0
    %2663 = vmatpush1.msra.mxu0 0.0
    %2664 = vmatprep.subr.mxu0 0.0
    %2665 = vmatpush1.msra.mxu0 0.0
    %2666 = vmatprep.subr.mxu0 0.0
    %2667 = vmatpush1.msra.mxu0 0.0
    %2668 = vmatprep.subr.mxu0 0.0
    %2669 = vmatpush1.msra.mxu0 0.0
    %2670 = vmatprep.subr.mxu0 0.0
    %2671 = vmatpush1.msra.mxu0 0.0
    %2672 = vmatprep.subr.mxu0 0.0
    %2673 = vmatpush1.msra.mxu0 0.0
    %2674 = vmatprep.subr.mxu0 0.0
    %2675 = vmatpush1.msra.mxu0 0.0
    %2676 = vmatprep.subr.mxu0 0.0
    %2677 = vmatpush1.msra.mxu0 0.0
    %2678 = vmatprep.subr.mxu0 0.0
    %2679 = vmatpush1.msra.mxu0 0.0
    %2680 = vmatprep.subr.mxu0 0.0
    %2681 = vmatpush1.msra.mxu0 0.0
    %2682 = vmatprep.subr.mxu0 0.0
    %2683 = vmatpush1.msra.mxu0 0.0
    %2684 = vmatprep.subr.mxu0 0.0
    %2685 = vmatpush1.msra.mxu0 0.0
    %2686 = vmatprep.subr.mxu0 0.0
    %2687 = vmatpush1.msra.mxu0 0.0
    %2688 = vmatprep.subr.mxu0 0.0
    %2689 = vmatpush1.msra.mxu0 0.0
    %2690 = vmatprep.subr.mxu0 0.0
    %2691 = vmatpush1.msra.mxu0 0.0
    %2692 = vmatprep.subr.mxu0 0.0
    %2693 = vmatpush1.msra.mxu0 0.0
    %2694 = vmatprep.subr.mxu0 0.0
    %2695 = vmatpush1.msra.mxu0 0.0
    %2696 = vmatprep.subr.mxu0 0.0
    %2697 = vmatpush1.msra.mxu0 0.0
    %2698 = vmatprep.subr.mxu0 0.0
    %2699 = vmatpush1.msra.mxu0 0.0
    %2700 = vmatprep.subr.mxu0 0.0
    %2701 = vmatpush1.msra.mxu0 0.0
    %2702 = vmatprep.subr.mxu0 0.0
    %2703 = vmatpush1.msra.mxu0 0.0
    %2704 = vmatprep.subr.mxu0 0.0
    %2705 = vmatpush1.msra.mxu0 0.0
    %2706 = vmatprep.mubr.f32.mxu0 0.0
    %2707 = vmatmul.mubr.f32.gmra.mrb[0].mxu0 %v2640
    %v2708 = vpop.f32.mrb[0].mxu0
    %v2709 = vadd.f32 %v2638, %v2708
    %v2710 = vpop.f32.mrb[0].mxu0
    %2711 = vdwg.mxu0
    %2712 = vst [vmem:[#allocation3] sm:$0x1] %v2709
    // Predicated region
    $region26: #{tpu_custom_call.1} parent=1 // pred_check
      _
    $region27: #{tpu_custom_call.1} parent=1 // pred_check_branch
      %2714 = sbr.rel (0) target = $region29
    $region28: #{tpu_custom_call.1} parent=1 // pred_region
      %s2716 = ssub.s32 16, 16
      %2717 = vsyncadd [#allocation4], %s2716
      %s2719 = sshll.u32 [#allocation3], 4
      %s2720 = int_to_ptr.vmem [resolvable:$true] %s2719
      %2722 = dma.vmem_to_hbm [thread:$0]  %s2720, 16, %s6, [#allocation4]
    $region29: #{tpu_custom_call.1} parent=1 // pred_fallthru
      _
    // Predicated region
    $region30: #{tpu_custom_call.1} parent=1 // pred_check
      _
    $region31: #{tpu_custom_call.1} parent=1 // pred_check_branch
      %2724 = sbr.rel (0) target = $region33
    $region32: #{tpu_custom_call.1} parent=1 // pred_region
      %2725 = dma.done [#allocation4], 16
    $region33: #{tpu_custom_call.1} parent=1 // pred_fallthru
      _
    %2726 = vsyncpa [#allocation4], 1

</llo_original>
